<compile_context>
chip_gen: v6e
topology: v6e:2x2x1
jax: 0.10.0
libtpu: 0.0.40
codegen_flags: <defaults>
</compile_context>

<pallas_src>
import jax
import jax.numpy as jnp
import numpy as np
from jax import lax
from jax.experimental import pallas as pl
from jax.experimental.pallas import tpu as pltpu

THETA_INIT = 0.1


def _jumprelu_sae_kernel(h_ref, w_enc_ref, w_dec_ref, b_dec_ref, b_enc_ref,
                         theta_ref,
                         acts_ref, hrec_ref, lrec_ref, lsp_ref,
                         hrec_acc, lsp_acc):
    s = pl.program_id(2)
    n_s = pl.num_programs(2)

    h = h_ref[0]             # (TB, d_in)
    w_enc = w_enc_ref[0]     # (d_in, TS)
    w_dec = w_dec_ref[0]     # (TS, d_in)
    b_dec = b_dec_ref[0]     # (1, d_in)
    b_enc = b_enc_ref[0]     # (1, TS)
    theta = theta_ref[0]     # (1, TS)

    @pl.when(s == 0)
    def _():
        hrec_acc[...] = jnp.zeros_like(hrec_acc)
        lsp_acc[...] = jnp.zeros_like(lsp_acc)

    # Encoder tile: acts_pre = (h - b_dec) @ W_enc + b_enc   (f32 accumulate)
    h_cent = h - b_dec
    acts_pre = (jnp.dot(h_cent, w_enc, preferred_element_type=jnp.float32)
                + b_enc.astype(jnp.float32))
    acts_relu = jnp.maximum(acts_pre, 0.0)

    # JumpReLU gate; Heaviside forward uses the same strict comparison.
    gate = (acts_relu > theta.astype(jnp.float32)).astype(jnp.float32)
    acts_post = acts_relu * gate

    acts_ref[0] = acts_post.astype(acts_ref.dtype)

    # Decoder partial product, accumulated over d_sae tiles in f32.
    hrec_acc[...] += jnp.dot(acts_post.astype(w_dec.dtype), w_dec,
                             preferred_element_type=jnp.float32)
    lsp_acc[...] += jnp.sum(gate, axis=-1, keepdims=True)

    @pl.when(s == n_s - 1)
    def _():
        h_rec = hrec_acc[...] + b_dec.astype(jnp.float32)
        hrec_ref[0] = h_rec.astype(hrec_ref.dtype)
        diff = h_rec - h.astype(jnp.float32)
        lrec_ref[0] = jnp.mean(diff * diff, axis=-1, keepdims=True)
        lsp_ref[0] = lsp_acc[...]


def _pick_tile(dim, candidates):
    for c in candidates:
        if c <= dim and dim % c == 0:
            return c
    return dim


def _vmem_limit_bytes():
    """Scoped-VMEM limit: raise above the 16/32 MiB default, stay under physical."""
    try:
        cap = int(pltpu.get_tpu_info().vmem_capacity_bytes)
    except Exception:
        cap = 64 * 1024 * 1024  # conservative (v7x-sized) fallback
    return max(32 * 1024 * 1024, min(int(cap * 0.85), 100 * 1024 * 1024))


def jumprelu_sae_forward(h, w_enc, w_dec, b_dec, b_enc, log_theta,
                         sparsity_coeff=0.2, *, tb=None, ts=None):
    """JumpReLUToySAE.forward.  h: (batch, inst, d_in), PyTorch layout.

    Returns (loss_dict, loss, acts_post, h_reconstructed) with the same
    shapes/semantics as the PyTorch module (loss terms per (batch, inst))."""
    batch, n_inst, d_in = h.shape
    d_sae = w_enc.shape[-1]

    vmem_limit = _vmem_limit_bytes()

    # --- tile selection: batch tile is the MXU M dim, d_sae tile is the reduction ---
    if tb is None:
        tb = _pick_tile(batch, (512, 256, 128, 64, 32, 16, 8))
    if ts is None:
        ts = _pick_tile(d_sae, (2048, 1024, 512, 256, 128))
    assert batch % tb == 0 and d_sae % ts == 0, "tiles must divide batch / d_sae"

    in_bytes = jnp.dtype(h.dtype).itemsize
    w_bytes = jnp.dtype(w_enc.dtype).itemsize

    def _footprint(tb_, ts_):
        # double-buffered pipeline inputs/outputs + persistent scratch
        ins = 2 * ((tb_ * d_in) * in_bytes
                   + (d_in * ts_ + ts_ * d_in) * w_bytes
                   + (d_in + 2 * ts_) * w_bytes)
        outs = 2 * ((tb_ * ts_ + tb_ * d_in) * in_bytes + 2 * tb_ * 4)
        scratch = (tb_ * d_in + tb_) * 4
        return ins + outs + scratch

    budget = int(0.6 * vmem_limit)  # shrinks automatically on 64 MiB chips (v7x)
    while _footprint(tb, ts) > budget and ts > 128 and ts % 2 == 0:
        ts //= 2
    while _footprint(tb, ts) > budget and tb > 8 and tb % 2 == 0:
        tb //= 2

    # --- instance-major layout for the kernel ---
    # TODO(synk): indexing the PyTorch (batch, inst, ...) layout directly needs a
    # size-1 second-minor block, which violates the (8,128) BlockSpec constraint;
    # so we re-layout here instead of in the index_map.
    h_t = jnp.transpose(h, (1, 0, 2))                        # (inst, batch, d_in)
    b_dec_r = b_dec.reshape(n_inst, 1, d_in)
    b_enc_r = b_enc.reshape(n_inst, 1, d_sae)
    theta_r = jnp.exp(log_theta).reshape(n_inst, 1, d_sae)   # exp hoisted out of kernel

    grid = (n_inst, batch // tb, d_sae // ts)

    in_specs = [
        pl.BlockSpec((1, tb, d_in), lambda i, b, s: (i, b, 0)),   # h
        pl.BlockSpec((1, d_in, ts), lambda i, b, s: (i, 0, s)),   # W_enc
        pl.BlockSpec((1, ts, d_in), lambda i, b, s: (i, s, 0)),   # W_dec
        pl.BlockSpec((1, 1, d_in), lambda i, b, s: (i, 0, 0)),    # b_dec
        pl.BlockSpec((1, 1, ts), lambda i, b, s: (i, 0, s)),      # b_enc
        pl.BlockSpec((1, 1, ts), lambda i, b, s: (i, 0, s)),      # theta
    ]
    out_specs = (
        pl.BlockSpec((1, tb, ts), lambda i, b, s: (i, b, s)),     # acts_post
        pl.BlockSpec((1, tb, d_in), lambda i, b, s: (i, b, 0)),   # h_rec
        pl.BlockSpec((1, tb, 1), lambda i, b, s: (i, b, 0)),      # L_reconstruction
        pl.BlockSpec((1, tb, 1), lambda i, b, s: (i, b, 0)),      # L_sparsity
    )
    out_shapes = (
        jax.ShapeDtypeStruct((n_inst, batch, d_sae), h.dtype),
        jax.ShapeDtypeStruct((n_inst, batch, d_in), h.dtype),
        jax.ShapeDtypeStruct((n_inst, batch, 1), jnp.float32),
        jax.ShapeDtypeStruct((n_inst, batch, 1), jnp.float32),
    )

    acts_t, hrec_t, lrec_t, lsp_t = pl.pallas_call(
        _jumprelu_sae_kernel,
        out_shape=out_shapes,
        grid=grid,
        in_specs=in_specs,
        out_specs=out_specs,
        scratch_shapes=[pltpu.VMEM((tb, d_in), jnp.float32),
                        pltpu.VMEM((tb, 1), jnp.float32)],
        compiler_params=pltpu.CompilerParams(
            dimension_semantics=("parallel", "parallel", "arbitrary"),
            vmem_limit_bytes=vmem_limit),
    )(h_t, w_enc, w_dec, b_dec_r, b_enc_r, theta_r)

    # Back to PyTorch layout; total loss composed in the wrapper (keeps the
    # kernel to two 1-lane outputs instead of three).
    acts_post = jnp.transpose(acts_t, (1, 0, 2))      # (batch, inst, d_sae)
    h_rec = jnp.transpose(hrec_t, (1, 0, 2))          # (batch, inst, d_in)
    l_rec = lrec_t[..., 0].T                          # (batch, inst)
    l_sp = lsp_t[..., 0].T                            # (batch, inst)
    loss = l_rec + sparsity_coeff * l_sp

    loss_dict = {"L_reconstruction": l_rec, "L_sparsity": l_sp}
    return loss_dict, loss, acts_post, h_rec


def _reference_forward(h, w_enc, w_dec, b_dec, b_enc, log_theta, sparsity_coeff):
    theta = jnp.exp(log_theta)
    h_cent = h - b_dec[None]
    acts_pre = jnp.einsum("bid,ids->bis", h_cent, w_enc,
                          precision=lax.Precision.HIGHEST) + b_enc[None]
    acts_relu = jnp.maximum(acts_pre, 0.0)
    gate = (acts_relu > theta[None]).astype(jnp.float32)
    acts_post = acts_relu * gate
    h_rec = jnp.einsum("bis,isd->bid", acts_post, w_dec,
                       precision=lax.Precision.HIGHEST) + b_dec[None]
    l_rec = jnp.mean((h_rec - h) ** 2, axis=-1)
    l_sp = jnp.sum(gate, axis=-1)
    loss = l_rec + sparsity_coeff * l_sp
    return l_rec, l_sp, loss, acts_post, h_rec


if __name__ == "__main__":
    # Small shapes consistent with the module: h is (batch, inst, d_in).
    batch, n_inst, d_in, d_sae = 256, 2, 128, 256
    sparsity_coeff = 0.2

    key = jax.random.PRNGKey(0)
    k_h, k_enc, k_dec, k_bd, k_be = jax.random.split(key, 5)

    # Quantized (power-of-two grid) values: the encoder matmul is then exactly
    # representable in f32, so JumpReLU gate decisions match the reference
    # bit-for-bit and the test is not flaky at the threshold.
    h = jax.random.randint(k_h, (batch, n_inst, d_in), -8, 9).astype(jnp.float32) / 8.0
    w_enc = jax.random.randint(k_enc, (n_inst, d_in, d_sae), -4, 5).astype(jnp.float32) / 128.0
    w_dec = jax.random.randint(k_dec, (n_inst, d_sae, d_in), -4, 5).astype(jnp.float32) / 128.0
    b_dec = jax.random.randint(k_bd, (n_inst, d_in), -4, 5).astype(jnp.float32) / 8.0
    b_enc = jax.random.randint(k_be, (n_inst, d_sae), -4, 5).astype(jnp.float32) / 1024.0
    log_theta = jnp.full((n_inst, d_sae), float(np.log(THETA_INIT)), jnp.float32)

    # tb/ts forced small here so the test exercises multiple batch tiles and the
    # d_sae accumulation loop; in real use leave them None for auto-sizing.
    loss_dict, loss, acts_post, h_rec = jumprelu_sae_forward(
        h, w_enc, w_dec, b_dec, b_enc, log_theta, sparsity_coeff,
        tb=128, ts=128)
    jax.block_until_ready((loss, acts_post, h_rec))

    # Pure-JAX reference check.
    l_rec_ref, l_sp_ref, loss_ref, acts_ref, hrec_ref = _reference_forward(
        h, w_enc, w_dec, b_dec, b_enc, log_theta, sparsity_coeff)

    ok = (
        np.allclose(loss_dict["L_reconstruction"], l_rec_ref, rtol=1e-4, atol=1e-5)
        and np.allclose(loss_dict["L_sparsity"], l_sp_ref, rtol=1e-4, atol=1e-5)
        and np.allclose(loss, loss_ref, rtol=1e-4, atol=1e-5)
        and np.allclose(acts_post, acts_ref, rtol=1e-4, atol=1e-5)
        and np.allclose(h_rec, hrec_ref, rtol=1e-4, atol=1e-5)
    )
    assert ok, "Pallas kernel output mismatch vs reference"
    print("KERNEL_OK")
</pallas_src>

<mosaic_0001>
module attributes {stable_mosaic.version = 11 : i64} {
  func.func @_jumprelu_sae_kernel(%arg0: i32, %arg1: i32, %arg2: i32, %arg3: memref<1x128x128xf32, #tpu.memory_space<vmem>>, %arg4: memref<1x128x128xf32, #tpu.memory_space<vmem>>, %arg5: memref<1x128x128xf32, #tpu.memory_space<vmem>>, %arg6: memref<1x1x128xf32, #tpu.memory_space<vmem>>, %arg7: memref<1x1x128xf32, #tpu.memory_space<vmem>>, %arg8: memref<1x1x128xf32, #tpu.memory_space<vmem>>, %arg9: memref<1x128x128xf32, #tpu.memory_space<vmem>>, %arg10: memref<1x128x128xf32, #tpu.memory_space<vmem>>, %arg11: memref<1x128x1xf32, #tpu.memory_space<vmem>>, %arg12: memref<1x128x1xf32, #tpu.memory_space<vmem>>, %arg13: memref<128x128xf32, #tpu.memory_space<vmem>>, %arg14: memref<128x1xf32, #tpu.memory_space<vmem>>) attributes {dimension_semantics = [#tpu.dimension_semantics<parallel>, #tpu.dimension_semantics<parallel>, #tpu.dimension_semantics<arbitrary>], iteration_bounds = array<i64: 2, 2, 2>, scalar_prefetch = 0 : i64, scratch_operands = 2 : i64, tpu.core_type = #tpu.core_type<tc>, window_params = [{transform_indices = @transform_0, window_bounds = array<i64: 1, 128, 128>}, {transform_indices = @transform_1, window_bounds = array<i64: 1, 128, 128>}, {transform_indices = @transform_2, window_bounds = array<i64: 1, 128, 128>}, {transform_indices = @transform_3, window_bounds = array<i64: 1, 1, 128>}, {transform_indices = @transform_4, window_bounds = array<i64: 1, 1, 128>}, {transform_indices = @transform_5, window_bounds = array<i64: 1, 1, 128>}, {transform_indices = @transform_6, window_bounds = array<i64: 1, 128, 128>}, {transform_indices = @transform_7, window_bounds = array<i64: 1, 128, 128>}, {transform_indices = @transform_8, window_bounds = array<i64: 1, 128, 1>}, {transform_indices = @transform_9, window_bounds = array<i64: 1, 128, 1>}]} {
    %c0 = arith.constant 0 : index
    %c0_0 = arith.constant 0 : index
    %c0_1 = arith.constant 0 : index
    %0 = vector.load %arg3[%c0, %c0_0, %c0_1] : memref<1x128x128xf32, #tpu.memory_space<vmem>>, vector<1x128x128xf32>
    %1 = vector.shape_cast %0 : vector<1x128x128xf32> to vector<128x128xf32>
    %c0_2 = arith.constant 0 : index
    %c0_3 = arith.constant 0 : index
    %c0_4 = arith.constant 0 : index
    %2 = vector.load %arg4[%c0_2, %c0_3, %c0_4] : memref<1x128x128xf32, #tpu.memory_space<vmem>>, vector<1x128x128xf32>
    %3 = vector.shape_cast %2 : vector<1x128x128xf32> to vector<128x128xf32>
    %c0_5 = arith.constant 0 : index
    %c0_6 = arith.constant 0 : index
    %c0_7 = arith.constant 0 : index
    %4 = vector.load %arg5[%c0_5, %c0_6, %c0_7] : memref<1x128x128xf32, #tpu.memory_space<vmem>>, vector<1x128x128xf32>
    %5 = vector.shape_cast %4 : vector<1x128x128xf32> to vector<128x128xf32>
    %c0_8 = arith.constant 0 : index
    %c0_9 = arith.constant 0 : index
    %c0_10 = arith.constant 0 : index
    %6 = vector.load %arg6[%c0_8, %c0_9, %c0_10] : memref<1x1x128xf32, #tpu.memory_space<vmem>>, vector<1x1x128xf32>
    %7 = vector.shape_cast %6 : vector<1x1x128xf32> to vector<1x128xf32>
    %c0_11 = arith.constant 0 : index
    %c0_12 = arith.constant 0 : index
    %c0_13 = arith.constant 0 : index
    %8 = vector.load %arg7[%c0_11, %c0_12, %c0_13] : memref<1x1x128xf32, #tpu.memory_space<vmem>>, vector<1x1x128xf32>
    %9 = vector.shape_cast %8 : vector<1x1x128xf32> to vector<1x128xf32>
    %c0_14 = arith.constant 0 : index
    %c0_15 = arith.constant 0 : index
    %c0_16 = arith.constant 0 : index
    %10 = vector.load %arg8[%c0_14, %c0_15, %c0_16] : memref<1x1x128xf32, #tpu.memory_space<vmem>>, vector<1x1x128xf32>
    %11 = vector.shape_cast %10 : vector<1x1x128xf32> to vector<1x128xf32>
    %c0_i32 = arith.constant 0 : i32
    %12 = arith.cmpi eq, %arg2, %c0_i32 : i32
    %13 = arith.extui %12 : i1 to i32
    %c0_i32_17 = arith.constant 0 : i32
    %14 = arith.cmpi ne, %13, %c0_i32_17 : i32
    scf.if %14 {
      %cst_33 = arith.constant 0.000000e+00 : f32
      %42 = vector.broadcast %cst_33 : f32 to vector<128x128xf32>
      %c0_34 = arith.constant 0 : index
      %c0_35 = arith.constant 0 : index
      %43 = vector.load %arg13[%c0_34, %c0_35] : memref<128x128xf32, #tpu.memory_space<vmem>>, vector<128x128xf32>
      tpu.vector_store %arg13[%c0_34, %c0_35], %42 {strides = array<i32>} : memref<128x128xf32, #tpu.memory_space<vmem>>, vector<128x128xf32>,
      %cst_36 = arith.constant 0.000000e+00 : f32
      %44 = vector.broadcast %cst_36 : f32 to vector<128x1xf32>
      %c0_37 = arith.constant 0 : index
      %c0_38 = arith.constant 0 : index
      %45 = vector.load %arg14[%c0_37, %c0_38] : memref<128x1xf32, #tpu.memory_space<vmem>>, vector<128x1xf32>
      tpu.vector_store %arg14[%c0_37, %c0_38], %44 {strides = array<i32>} : memref<128x1xf32, #tpu.memory_space<vmem>>, vector<128x1xf32>,
    } else {
    }
    %15 = vector.broadcast %7 : vector<1x128xf32> to vector<128x128xf32>
    %16 = arith.subf %1, %15 : vector<128x128xf32>
    %cst = arith.constant dense<0.000000e+00> : vector<128x128xf32>
    %17 = tpu.matmul %16, %3, %cst {dimension_numbers = #tpu.dot_dimension_numbers<[1], [0], [0], [1], [0, 0, 1, 1], [], []>} : vector<128x128xf32>, vector<128x128xf32>, vector<128x128xf32> -> vector<128x128xf32>
    %18 = vector.broadcast %9 : vector<1x128xf32> to vector<128x128xf32>
    %19 = arith.addf %17, %18 : vector<128x128xf32>
    %cst_18 = arith.constant 0.000000e+00 : f32
    %20 = vector.broadcast %cst_18 : f32 to vector<128x128xf32>
    %21 = arith.maximumf %19, %20 : vector<128x128xf32>
    %22 = vector.broadcast %11 : vector<1x128xf32> to vector<128x128xf32>
    %23 = arith.cmpf ogt, %21, %22 : vector<128x128xf32>
    %24 = arith.extui %23 : vector<128x128xi1> to vector<128x128xi32>
    %25 = arith.sitofp %24 : vector<128x128xi32> to vector<128x128xf32>
    %26 = arith.mulf %21, %25 : vector<128x128xf32>
    %c0_19 = arith.constant 0 : index
    %c0_20 = arith.constant 0 : index
    %c0_21 = arith.constant 0 : index
    %27 = vector.load %arg9[%c0_19, %c0_20, %c0_21] : memref<1x128x128xf32, #tpu.memory_space<vmem>>, vector<1x128x128xf32>
    %28 = vector.shape_cast %27 : vector<1x128x128xf32> to vector<128x128xf32>
    %29 = vector.shape_cast %26 : vector<128x128xf32> to vector<1x128x128xf32>
    tpu.vector_store %arg9[%c0_19, %c0_20, %c0_21], %29 {strides = array<i32>} : memref<1x128x128xf32, #tpu.memory_space<vmem>>, vector<1x128x128xf32>,
    %c0_22 = arith.constant 0 : index
    %c0_23 = arith.constant 0 : index
    %30 = vector.load %arg13[%c0_22, %c0_23] : memref<128x128xf32, #tpu.memory_space<vmem>>, vector<128x128xf32>
    %cst_24 = arith.constant dense<0.000000e+00> : vector<128x128xf32>
    %31 = tpu.matmul %26, %5, %cst_24 {dimension_numbers = #tpu.dot_dimension_numbers<[1], [0], [0], [1], [0, 0, 1, 1], [], []>} : vector<128x128xf32>, vector<128x128xf32>, vector<128x128xf32> -> vector<128x128xf32>
    %32 = arith.addf %30, %31 : vector<128x128xf32>
    %c0_25 = arith.constant 0 : index
    %c0_26 = arith.constant 0 : index
    %33 = vector.load %arg13[%c0_25, %c0_26] : memref<128x128xf32, #tpu.memory_space<vmem>>, vector<128x128xf32>
    tpu.vector_store %arg13[%c0_25, %c0_26], %32 {strides = array<i32>} : memref<128x128xf32, #tpu.memory_space<vmem>>, vector<128x128xf32>,
    %c0_27 = arith.constant 0 : index
    %c0_28 = arith.constant 0 : index
    %34 = vector.load %arg14[%c0_27, %c0_28] : memref<128x1xf32, #tpu.memory_space<vmem>>, vector<128x1xf32>
    %cst_29 = arith.constant dense<0.000000e+00> : vector<128xf32>
    %35 = vector.multi_reduction <add>, %25, %cst_29 [1] : vector<128x128xf32> to vector<128xf32>
    %36 = vector.shape_cast %35 : vector<128xf32> to vector<128x1xf32>
    %37 = arith.addf %34, %36 : vector<128x1xf32>
    %c0_30 = arith.constant 0 : index
    %c0_31 = arith.constant 0 : index
    %38 = vector.load %arg14[%c0_30, %c0_31] : memref<128x1xf32, #tpu.memory_space<vmem>>, vector<128x1xf32>
    tpu.vector_store %arg14[%c0_30, %c0_31], %37 {strides = array<i32>} : memref<128x1xf32, #tpu.memory_space<vmem>>, vector<128x1xf32>,
    %c1_i32 = arith.constant 1 : i32
    %39 = arith.cmpi eq, %arg2, %c1_i32 : i32
    %40 = arith.extui %39 : i1 to i32
    %c0_i32_32 = arith.constant 0 : i32
    %41 = arith.cmpi ne, %40, %c0_i32_32 : i32
    scf.if %41 {
      %c0_33 = arith.constant 0 : index
      %c0_34 = arith.constant 0 : index
      %42 = vector.load %arg13[%c0_33, %c0_34] : memref<128x128xf32, #tpu.memory_space<vmem>>, vector<128x128xf32>
      %43 = vector.broadcast %7 : vector<1x128xf32> to vector<128x128xf32>
      %44 = arith.addf %42, %43 : vector<128x128xf32>
      %c0_35 = arith.constant 0 : index
      %c0_36 = arith.constant 0 : index
      %c0_37 = arith.constant 0 : index
      %45 = vector.load %arg10[%c0_35, %c0_36, %c0_37] : memref<1x128x128xf32, #tpu.memory_space<vmem>>, vector<1x128x128xf32>
      %46 = vector.shape_cast %45 : vector<1x128x128xf32> to vector<128x128xf32>
      %47 = vector.shape_cast %44 : vector<128x128xf32> to vector<1x128x128xf32>
      tpu.vector_store %arg10[%c0_35, %c0_36, %c0_37], %47 {strides = array<i32>} : memref<1x128x128xf32, #tpu.memory_space<vmem>>, vector<1x128x128xf32>,
      %48 = arith.subf %44, %1 : vector<128x128xf32>
      %49 = arith.mulf %48, %48 : vector<128x128xf32>
      %cst_38 = arith.constant dense<0.000000e+00> : vector<128xf32>
      %50 = vector.multi_reduction <add>, %49, %cst_38 [1] : vector<128x128xf32> to vector<128xf32>
      %51 = vector.shape_cast %50 : vector<128xf32> to vector<128x1xf32>
      %cst_39 = arith.constant 1.280000e+02 : f32
      %52 = vector.broadcast %cst_39 : f32 to vector<128x1xf32>
      %53 = arith.divf %51, %52 : vector<128x1xf32>
      %c0_40 = arith.constant 0 : index
      %c0_41 = arith.constant 0 : index
      %c0_42 = arith.constant 0 : index
      %54 = vector.load %arg11[%c0_40, %c0_41, %c0_42] : memref<1x128x1xf32, #tpu.memory_space<vmem>>, vector<1x128x1xf32>
      %55 = vector.shape_cast %54 : vector<1x128x1xf32> to vector<128x1xf32>
      %56 = vector.shape_cast %53 : vector<128x1xf32> to vector<1x128x1xf32>
      tpu.vector_store %arg11[%c0_40, %c0_41, %c0_42], %56 {strides = array<i32>} : memref<1x128x1xf32, #tpu.memory_space<vmem>>, vector<1x128x1xf32>,
      %c0_43 = arith.constant 0 : index
      %c0_44 = arith.constant 0 : index
      %57 = vector.load %arg14[%c0_43, %c0_44] : memref<128x1xf32, #tpu.memory_space<vmem>>, vector<128x1xf32>
      %c0_45 = arith.constant 0 : index
      %c0_46 = arith.constant 0 : index
      %c0_47 = arith.constant 0 : index
      %58 = vector.load %arg12[%c0_45, %c0_46, %c0_47] : memref<1x128x1xf32, #tpu.memory_space<vmem>>, vector<1x128x1xf32>
      %59 = vector.shape_cast %58 : vector<1x128x1xf32> to vector<128x1xf32>
      %60 = vector.shape_cast %57 : vector<128x1xf32> to vector<1x128x1xf32>
      tpu.vector_store %arg12[%c0_45, %c0_46, %c0_47], %60 {strides = array<i32>} : memref<1x128x1xf32, #tpu.memory_space<vmem>>, vector<1x128x1xf32>,
    } else {
    }
    return
  }
  func.func @transform_0(%arg0: i32, %arg1: i32, %arg2: i32) -> (i32, i32, i32) {
    %c0_i32 = arith.constant 0 : i32
    %c0_i32_0 = arith.constant 0 : i32
    return %arg0, %arg1, %c0_i32 : i32, i32, i32
  }
  func.func @transform_1(%arg0: i32, %arg1: i32, %arg2: i32) -> (i32, i32, i32) {
    %c0_i32 = arith.constant 0 : i32
    %c0_i32_0 = arith.constant 0 : i32
    return %arg0, %c0_i32, %arg2 : i32, i32, i32
  }
  func.func @transform_2(%arg0: i32, %arg1: i32, %arg2: i32) -> (i32, i32, i32) {
    %c0_i32 = arith.constant 0 : i32
    %c0_i32_0 = arith.constant 0 : i32
    return %arg0, %arg2, %c0_i32 : i32, i32, i32
  }
  func.func @transform_3(%arg0: i32, %arg1: i32, %arg2: i32) -> (i32, i32, i32) {
    %c0_i32 = arith.constant 0 : i32
    %c0_i32_0 = arith.constant 0 : i32
    %c0_i32_1 = arith.constant 0 : i32
    return %arg0, %c0_i32, %c0_i32_0 : i32, i32, i32
  }
  func.func @transform_4(%arg0: i32, %arg1: i32, %arg2: i32) -> (i32, i32, i32) {
    %c0_i32 = arith.constant 0 : i32
    %c0_i32_0 = arith.constant 0 : i32
    return %arg0, %c0_i32, %arg2 : i32, i32, i32
  }
  func.func @transform_5(%arg0: i32, %arg1: i32, %arg2: i32) -> (i32, i32, i32) {
    %c0_i32 = arith.constant 0 : i32
    %c0_i32_0 = arith.constant 0 : i32
    return %arg0, %c0_i32, %arg2 : i32, i32, i32
  }
  func.func @transform_6(%arg0: i32, %arg1: i32, %arg2: i32) -> (i32, i32, i32) {
    %c0_i32 = arith.constant 0 : i32
    return %arg0, %arg1, %arg2 : i32, i32, i32
  }
  func.func @transform_7(%arg0: i32, %arg1: i32, %arg2: i32) -> (i32, i32, i32) {
    %c0_i32 = arith.constant 0 : i32
    %c0_i32_0 = arith.constant 0 : i32
    return %arg0, %arg1, %c0_i32 : i32, i32, i32
  }
  func.func @transform_8(%arg0: i32, %arg1: i32, %arg2: i32) -> (i32, i32, i32) {
    %c0_i32 = arith.constant 0 : i32
    %c0_i32_0 = arith.constant 0 : i32
    return %arg0, %arg1, %c0_i32 : i32, i32, i32
  }
  func.func @transform_9(%arg0: i32, %arg1: i32, %arg2: i32) -> (i32, i32, i32) {
    %c0_i32 = arith.constant 0 : i32
    %c0_i32_0 = arith.constant 0 : i32
    return %arg0, %arg1, %c0_i32 : i32, i32, i32
  }
}

</mosaic_0001>

<llo_original>
// kernel: tpu_custom_call.1
$region0: #{tpu_custom_call.1}
  #allocation0 [shape = 'u32[]', space=smem, size = 0x4, offset = 0x4, fixed_abs, tag = 'smem constant byte address 0x4 - core index']
  #allocation1 [shape = 'u32[144,128]{1,0:T(1,128)}', space=vmem, size = 0x12000, scoped, tag = 'internal scratch']
  #allocation2 [shape = 'f32[128,128]{1,0:T(8,128)}', space=vmem, size = 0x10000, scoped, tag = 'scratch operand']
  #allocation3 [shape = 'f32[128,1]{1,0:T(8,128)}', space=vmem, size = 0x10000, scoped, tag = 'scratch operand']
  %s0 = inlined_call_operand.hbm [shape: f32[2,256,128], index: 0, kind: input, shape index: {}]
  %s1 = inlined_call_operand.hbm [shape: f32[2,128,256], index: 1, kind: input, shape index: {}]
  %s2 = inlined_call_operand.hbm [shape: f32[2,256,128], index: 2, kind: input, shape index: {}]
  %s3 = inlined_call_operand.hbm [shape: f32[2,1,128], index: 3, kind: input, shape index: {}]
  %s4 = inlined_call_operand.vmem [shape: f32[2,1,256], index: 4, kind: input, shape index: {}]
  %s5 = inlined_call_operand.vmem [shape: f32[2,1,256], index: 5, kind: input, shape index: {}]
  %s6 = inlined_call_operand.hbm [shape: f32[2,256,256], index: 6, kind: output, shape index: {0}]
  %s7 = inlined_call_operand.hbm [shape: f32[2,256,128], index: 7, kind: output, shape index: {1}]
  %s8 = inlined_call_operand.vmem [shape: f32[2,256,1], index: 8, kind: output, shape index: {2}]
  %s9 = inlined_call_operand.vmem [shape: f32[2,256,1], index: 9, kind: output, shape index: {3}]
  %10 = xla_tuple %s6, %s7, %s8, %s9
  %s11 = sld [smem:[#allocation0]]
  $region105: #{tpu_custom_call.1} parent=0
    _
  %s13 = ssub.s32 1, %s11
  %s14 = scalar_select 0, %s13, %s11
  $region1: #{tpu_custom_call.1} parent=0
    #allocation4 [shape = 'u8[131072]{0}', space=vmem, size = 0x20000, scoped, tag = 'input window, operand 0']
    #allocation5 [shape = 's32[2]{0}', space=sflag, size = 0x8, scoped, tag = 'scoped memory for tpu_custom_call.1']
    #allocation6 [shape = 's32[2]{0}', space=sflag, size = 0x8, scoped, tag = 'scoped memory for tpu_custom_call.1']
    #allocation7 [shape = 'u8[131072]{0}', space=vmem, size = 0x20000, scoped, tag = 'input window, operand 1']
    #allocation8 [shape = 's32[2]{0}', space=sflag, size = 0x8, scoped, tag = 'scoped memory for tpu_custom_call.1']
    #allocation9 [shape = 'u8[131072]{0}', space=vmem, size = 0x20000, scoped, tag = 'input window, operand 2']
    #allocation10 [shape = 'u8[1024]{0}', space=vmem, size = 0x400, scoped, tag = 'input window, operand 3']
    #allocation11 [shape = 's32[2]{0}', space=sflag, size = 0x8, scoped, tag = 'scoped memory for tpu_custom_call.1']
    #allocation12 [shape = 'u8[131072]{0}', space=vmem, size = 0x20000, scoped, tag = 'output window, operand 0']
    #allocation13 [shape = 'u8[131072]{0}', space=vmem, size = 0x20000, scoped, tag = 'output window, operand 1']
    #allocation14 [shape = 's32[2]{0}', space=sflag, size = 0x8, scoped, tag = 'scoped memory for tpu_custom_call.1']
    %15 = vsyncpa [#allocation5], 0
    %s16 = scalar_lea.sflag [#allocation5], 1
    %17 = vsyncpa %s16, 0
    %18 = vsyncpa [#allocation8], 0
    %s19 = scalar_lea.sflag [#allocation8], 1
    %20 = vsyncpa %s19, 0
    %21 = vsyncpa [#allocation11], 0
    %s22 = scalar_lea.sflag [#allocation11], 1
    %23 = vsyncpa %s22, 0
    %24 = vsyncpa [#allocation6], 0
    %s25 = scalar_lea.sflag [#allocation6], 1
    %26 = vsyncpa %s25, 0
    %27 = vsyncpa [#allocation14], 0
    %s28 = scalar_lea.sflag [#allocation14], 1
    %29 = vsyncpa %s28, 0
    loop: start=0, step=1, limit=10
    $region2: #{tpu_custom_call.1} parent=1 // loop_pre_header
      _
    $region3: #{tpu_custom_call.1} parent=1 // loop_header
      %s31 = sphi 0, %s35
      %p32 = scmp.ge.s32.totalorder %s31, 10
      %s38 = sphi 0, %s57
      %s39 = sphi 0, %s53
      %s40 = sphi 0, %s49
      %s41 = sphi 0, %s38
      %s42 = sphi 0, %s39
      %s43 = sphi 0, %s40
      %s44 = sphi 0, %s41
      %s45 = sphi 0, %s42
      %s46 = sphi 0, %s43
      %s62 = sphi 0, %s64
      %s65 = sphi 0, %s62
      %s66 = sphi 0, %s65
      %s82 = sphi 0, %s66
      %s90 = sphi 0, %s92
      %s93 = sphi 0, %s90
      %s94 = sphi 0, %s93
      %s110 = sphi 0, %s94
      %s118 = sphi 0, %s120
      %s121 = sphi 0, %s118
      %s122 = sphi 0, %s121
      %s138 = sphi 0, %s122
      %s144 = sphi 0, %s146
      %s147 = sphi 0, %s144
      %s148 = sphi 0, %s147
      %s164 = sphi 0, %s148
      %s172 = sphi 0, %s174
      %s175 = sphi 0, %s172
      %s176 = sphi 0, %s175
      %s192 = sphi 0, %s176
      %s200 = sphi 0, %s202
      %s203 = sphi 0, %s200
      %s204 = sphi 0, %s203
      %s220 = sphi 0, %s204
      %s230 = sphi 0, %s232
      %s233 = sphi 0, %s230
      %s234 = sphi 0, %s233
      %s250 = sphi 0, %s234
      %s258 = sphi 0, %s260
      %s261 = sphi 0, %s258
      %s262 = sphi 0, %s261
      %s278 = sphi 0, %s262
      %s286 = sphi 0, %s288
      %s289 = sphi 0, %s286
      %s290 = sphi 0, %s289
      %s306 = sphi 0, %s290
      %s314 = sphi 0, %s316
      %s317 = sphi 0, %s314
      %s318 = sphi 0, %s317
      %s334 = sphi 0, %s318
    $region4: #{tpu_custom_call.1} parent=1 // loop_header_branch
      %34 = sbr.rel (%p32) target = $region8
    $region5: #{tpu_custom_call.1} parent=1 // loop_body
      %s36 = ssub.s32 %s31, 1
      %s37 = ssub.s32 %s31, 2
      %s47 = sadd.s32 1, %s40
      %p48 = scmp.ge.s32.totalorder %s47, 2
      %s49 = scalar_select %p48, 0, %s47
      %s50 = sadd.s32 1, %s39
      %s51 = scalar_select %p48, %s50, %s39
      %p52 = scmp.ge.s32.totalorder %s51, 2
      %s53 = scalar_select %p52, 0, %s51
      %s54 = sadd.s32 1, %s38
      %s55 = scalar_select %p52, %s54, %s38
      %p56 = scmp.ge.s32.totalorder %s55, 2
      %s57 = scalar_select %p56, 0, %s55
      %s58 = ssub.s32 %s38, %s57
      %s59 = ssub.s32 %s39, %s53
      %s60 = sor.u32 %s58, %s59
      %p61 = scmp.eq.s32.totalorder %s60, 0
      %s63 = sadd.s32 %s62, 1
      %s64 = scalar_select %p61, %s62, %s63
      %p67 = pneg %p61
      %p68 = scmp.eq.s32.totalorder %s31, 7
      %p69 = por %p67, %p68
      %p70 = scmp.ne.s32.totalorder %s62, %s65
      %p71 = scmp.eq.s32.totalorder %s31, 0
      %p72 = por %p70, %p71
      %p73 = scmp.ne.s32.totalorder %s62, %s65
      %p74 = scmp.eq.s32.totalorder %s36, 7
      %p75 = por %p73, %p74
      %p76 = scmp.ne.s32.totalorder %s65, %s66
      %p77 = scmp.eq.s32.totalorder %s36, 0
      %p78 = por %p76, %p77
      %p79 = scmp.ne.s32.totalorder %s65, %s66
      %p80 = scmp.eq.s32.totalorder %s37, 7
      %p81 = por %p79, %p80
      %p83 = scmp.ne.s32.totalorder %s66, %s82
      %p84 = scmp.eq.s32.totalorder %s37, 0
      %p85 = por %p83, %p84
      %s86 = ssub.s32 %s38, %s57
      %s87 = ssub.s32 %s40, %s49
      %s88 = sor.u32 %s86, %s87
      %p89 = scmp.eq.s32.totalorder %s88, 0
      %s91 = sadd.s32 %s90, 1
      %s92 = scalar_select %p89, %s90, %s91
      %p95 = pneg %p89
      %p96 = scmp.eq.s32.totalorder %s31, 7
      %p97 = por %p95, %p96
      %p98 = scmp.ne.s32.totalorder %s90, %s93
      %p99 = scmp.eq.s32.totalorder %s31, 0
      %p100 = por %p98, %p99
      %p101 = scmp.ne.s32.totalorder %s90, %s93
      %p102 = scmp.eq.s32.totalorder %s36, 7
      %p103 = por %p101, %p102
      %p104 = scmp.ne.s32.totalorder %s93, %s94
      %p105 = scmp.eq.s32.totalorder %s36, 0
      %p106 = por %p104, %p105
      %p107 = scmp.ne.s32.totalorder %s93, %s94
      %p108 = scmp.eq.s32.totalorder %s37, 7
      %p109 = por %p107, %p108
      %p111 = scmp.ne.s32.totalorder %s94, %s110
      %p112 = scmp.eq.s32.totalorder %s37, 0
      %p113 = por %p111, %p112
      %s114 = ssub.s32 %s38, %s57
      %s115 = ssub.s32 %s40, %s49
      %s116 = sor.u32 %s114, %s115
      %p117 = scmp.eq.s32.totalorder %s116, 0
      %s119 = sadd.s32 %s118, 1
      %s120 = scalar_select %p117, %s118, %s119
      %p123 = pneg %p117
      %p124 = scmp.eq.s32.totalorder %s31, 7
      %p125 = por %p123, %p124
      %p126 = scmp.ne.s32.totalorder %s118, %s121
      %p127 = scmp.eq.s32.totalorder %s31, 0
      %p128 = por %p126, %p127
      %p129 = scmp.ne.s32.totalorder %s118, %s121
      %p130 = scmp.eq.s32.totalorder %s36, 7
      %p131 = por %p129, %p130
      %p132 = scmp.ne.s32.totalorder %s121, %s122
      %p133 = scmp.eq.s32.totalorder %s36, 0
      %p134 = por %p132, %p133
      %p135 = scmp.ne.s32.totalorder %s121, %s122
      %p136 = scmp.eq.s32.totalorder %s37, 7
      %p137 = por %p135, %p136
      %p139 = scmp.ne.s32.totalorder %s122, %s138
      %p140 = scmp.eq.s32.totalorder %s37, 0
      %p141 = por %p139, %p140
      %s142 = ssub.s32 %s38, %s57
      %p143 = scmp.eq.s32.totalorder %s142, 0
      %s145 = sadd.s32 %s144, 1
      %s146 = scalar_select %p143, %s144, %s145
      %p149 = pneg %p143
      %p150 = scmp.eq.s32.totalorder %s31, 7
      %p151 = por %p149, %p150
      %p152 = scmp.ne.s32.totalorder %s144, %s147
      %p153 = scmp.eq.s32.totalorder %s31, 0
      %p154 = por %p152, %p153
      %p155 = scmp.ne.s32.totalorder %s144, %s147
      %p156 = scmp.eq.s32.totalorder %s36, 7
      %p157 = por %p155, %p156
      %p158 = scmp.ne.s32.totalorder %s147, %s148
      %p159 = scmp.eq.s32.totalorder %s36, 0
      %p160 = por %p158, %p159
      %p161 = scmp.ne.s32.totalorder %s147, %s148
      %p162 = scmp.eq.s32.totalorder %s37, 7
      %p163 = por %p161, %p162
      %p165 = scmp.ne.s32.totalorder %s148, %s164
      %p166 = scmp.eq.s32.totalorder %s37, 0
      %p167 = por %p165, %p166
      %s168 = ssub.s32 %s38, %s57
      %s169 = ssub.s32 %s40, %s49
      %s170 = sor.u32 %s168, %s169
      %p171 = scmp.eq.s32.totalorder %s170, 0
      %s173 = sadd.s32 %s172, 1
      %s174 = scalar_select %p171, %s172, %s173
      %p177 = pneg %p171
      %p178 = scmp.eq.s32.totalorder %s31, 7
      %p179 = por %p177, %p178
      %p180 = scmp.ne.s32.totalorder %s172, %s175
      %p181 = scmp.eq.s32.totalorder %s31, 0
      %p182 = por %p180, %p181
      %p183 = scmp.ne.s32.totalorder %s172, %s175
      %p184 = scmp.eq.s32.totalorder %s36, 7
      %p185 = por %p183, %p184
      %p186 = scmp.ne.s32.totalorder %s175, %s176
      %p187 = scmp.eq.s32.totalorder %s36, 0
      %p188 = por %p186, %p187
      %p189 = scmp.ne.s32.totalorder %s175, %s176
      %p190 = scmp.eq.s32.totalorder %s37, 7
      %p191 = por %p189, %p190
      %p193 = scmp.ne.s32.totalorder %s176, %s192
      %p194 = scmp.eq.s32.totalorder %s37, 0
      %p195 = por %p193, %p194
      %s196 = ssub.s32 %s38, %s57
      %s197 = ssub.s32 %s40, %s49
      %s198 = sor.u32 %s196, %s197
      %p199 = scmp.eq.s32.totalorder %s198, 0
      %s201 = sadd.s32 %s200, 1
      %s202 = scalar_select %p199, %s200, %s201
      %p205 = pneg %p199
      %p206 = scmp.eq.s32.totalorder %s31, 7
      %p207 = por %p205, %p206
      %p208 = scmp.ne.s32.totalorder %s200, %s203
      %p209 = scmp.eq.s32.totalorder %s31, 0
      %p210 = por %p208, %p209
      %p211 = scmp.ne.s32.totalorder %s200, %s203
      %p212 = scmp.eq.s32.totalorder %s36, 7
      %p213 = por %p211, %p212
      %p214 = scmp.ne.s32.totalorder %s203, %s204
      %p215 = scmp.eq.s32.totalorder %s36, 0
      %p216 = por %p214, %p215
      %p217 = scmp.ne.s32.totalorder %s203, %s204
      %p218 = scmp.eq.s32.totalorder %s37, 7
      %p219 = por %p217, %p218
      %p221 = scmp.ne.s32.totalorder %s204, %s220
      %p222 = scmp.eq.s32.totalorder %s37, 0
      %p223 = por %p221, %p222
      %s224 = ssub.s32 %s38, %s57
      %s225 = ssub.s32 %s39, %s53
      %s226 = sor.u32 %s224, %s225
      %s227 = ssub.s32 %s40, %s49
      %s228 = sor.u32 %s226, %s227
      %p229 = scmp.eq.s32.totalorder %s228, 0
      %s231 = sadd.s32 %s230, 1
      %s232 = scalar_select %p229, %s230, %s231
      %p235 = pneg %p229
      %p236 = scmp.eq.s32.totalorder %s31, 7
      %p237 = por %p235, %p236
      %p238 = scmp.ne.s32.totalorder %s230, %s233
      %p239 = scmp.eq.s32.totalorder %s31, 0
      %p240 = por %p238, %p239
      %p241 = scmp.ne.s32.totalorder %s230, %s233
      %p242 = scmp.eq.s32.totalorder %s36, 7
      %p243 = por %p241, %p242
      %p244 = scmp.ne.s32.totalorder %s233, %s234
      %p245 = scmp.eq.s32.totalorder %s36, 0
      %p246 = por %p244, %p245
      %p247 = scmp.ne.s32.totalorder %s233, %s234
      %p248 = scmp.eq.s32.totalorder %s37, 7
      %p249 = por %p247, %p248
      %p251 = scmp.ne.s32.totalorder %s234, %s250
      %p252 = scmp.eq.s32.totalorder %s37, 0
      %p253 = por %p251, %p252
      %s254 = ssub.s32 %s38, %s57
      %s255 = ssub.s32 %s39, %s53
      %s256 = sor.u32 %s254, %s255
      %p257 = scmp.eq.s32.totalorder %s256, 0
      %s259 = sadd.s32 %s258, 1
      %s260 = scalar_select %p257, %s258, %s259
      %p263 = pneg %p257
      %p264 = scmp.eq.s32.totalorder %s31, 7
      %p265 = por %p263, %p264
      %p266 = scmp.ne.s32.totalorder %s258, %s261
      %p267 = scmp.eq.s32.totalorder %s31, 0
      %p268 = por %p266, %p267
      %p269 = scmp.ne.s32.totalorder %s258, %s261
      %p270 = scmp.eq.s32.totalorder %s36, 7
      %p271 = por %p269, %p270
      %p272 = scmp.ne.s32.totalorder %s261, %s262
      %p273 = scmp.eq.s32.totalorder %s36, 0
      %p274 = por %p272, %p273
      %p275 = scmp.ne.s32.totalorder %s261, %s262
      %p276 = scmp.eq.s32.totalorder %s37, 7
      %p277 = por %p275, %p276
      %p279 = scmp.ne.s32.totalorder %s262, %s278
      %p280 = scmp.eq.s32.totalorder %s37, 0
      %p281 = por %p279, %p280
      %s282 = ssub.s32 %s38, %s57
      %s283 = ssub.s32 %s39, %s53
      %s284 = sor.u32 %s282, %s283
      %p285 = scmp.eq.s32.totalorder %s284, 0
      %s287 = sadd.s32 %s286, 1
      %s288 = scalar_select %p285, %s286, %s287
      %p291 = pneg %p285
      %p292 = scmp.eq.s32.totalorder %s31, 7
      %p293 = por %p291, %p292
      %p294 = scmp.ne.s32.totalorder %s286, %s289
      %p295 = scmp.eq.s32.totalorder %s31, 0
      %p296 = por %p294, %p295
      %p297 = scmp.ne.s32.totalorder %s286, %s289
      %p298 = scmp.eq.s32.totalorder %s36, 7
      %p299 = por %p297, %p298
      %p300 = scmp.ne.s32.totalorder %s289, %s290
      %p301 = scmp.eq.s32.totalorder %s36, 0
      %p302 = por %p300, %p301
      %p303 = scmp.ne.s32.totalorder %s289, %s290
      %p304 = scmp.eq.s32.totalorder %s37, 7
      %p305 = por %p303, %p304
      %p307 = scmp.ne.s32.totalorder %s290, %s306
      %p308 = scmp.eq.s32.totalorder %s37, 0
      %p309 = por %p307, %p308
      %s310 = ssub.s32 %s38, %s57
      %s311 = ssub.s32 %s39, %s53
      %s312 = sor.u32 %s310, %s311
      %p313 = scmp.eq.s32.totalorder %s312, 0
      %s315 = sadd.s32 %s314, 1
      %s316 = scalar_select %p313, %s314, %s315
      %p319 = pneg %p313
      %p320 = scmp.eq.s32.totalorder %s31, 7
      %p321 = por %p319, %p320
      %p322 = scmp.ne.s32.totalorder %s314, %s317
      %p323 = scmp.eq.s32.totalorder %s31, 0
      %p324 = por %p322, %p323
      %p325 = scmp.ne.s32.totalorder %s314, %s317
      %p326 = scmp.eq.s32.totalorder %s36, 7
      %p327 = por %p325, %p326
      %p328 = scmp.ne.s32.totalorder %s317, %s318
      %p329 = scmp.eq.s32.totalorder %s36, 0
      %p330 = por %p328, %p329
      %p331 = scmp.ne.s32.totalorder %s317, %s318
      %p332 = scmp.eq.s32.totalorder %s37, 7
      %p333 = por %p331, %p332
      %p335 = scmp.ne.s32.totalorder %s318, %s334
      %p336 = scmp.eq.s32.totalorder %s37, 0
      %p337 = por %p335, %p336
      %p338 = scmp.le.s32.totalorder 1, %s31
      %p339 = scmp.lt.s32.totalorder %s31, 9
      %p340 = pnand %p338, %p339
      %p341 = pneg %p340
      // Predicated region
      $region9: #{tpu_custom_call.1} parent=5 // pred_check
        _
      $region10: #{tpu_custom_call.1} parent=5 // pred_check_branch
        %343 = sbr.rel (%p340) target = $region12
      $region11: #{tpu_custom_call.1} parent=5 // pred_region
        %s344 = ssub.s32 %s31, 1
      $region12: #{tpu_custom_call.1} parent=5 // pred_fallthru
        _
      %p345 = scmp.lt.s32.totalorder %s31, 8
      // Predicated region
      $region13: #{tpu_custom_call.1} parent=5 // pred_check
        %p346 = pneg %p345
      $region14: #{tpu_custom_call.1} parent=5 // pred_check_branch
        %348 = sbr.rel (%p346) target = $region16
      $region15: #{tpu_custom_call.1} parent=5 // pred_region
        // Predicated region
        $region17: #{tpu_custom_call.1} parent=15 // pred_check
          %p349 = pneg %p72
        $region18: #{tpu_custom_call.1} parent=15 // pred_check_branch
          %351 = sbr.rel (%p349) target = $region20
        $region19: #{tpu_custom_call.1} parent=15 // pred_region
          %s352 = sand.u32 %s62, 1
          %s353 = scalar_lea.sflag [#allocation5], %s352
          %s354 = sand.u32 %s62, 1
          %s355 = smul.addr %s354, 128
          %s356 = scalar_lea.vmem [#allocation4], %s355
          %s357 = smul.u32 16, %s39
          %s359 = ssub.s32 2048, 2048
          %360 = vsyncadd %s353, %s359
          %s361 = smul.addr %s38, 32
          %s362 = sadd.s32 %s357, %s361
          %s363 = smul.addr %s362, 128
          %s364 = scalar_lea.hbm %s0, %s363
          %s365 = sshll.u32 %s356, 4
          %s366 = int_to_ptr.vmem [resolvable:$true] %s365
          %371 = dma.hbm_to_vmem [thread:$0]  %s364, 2048, %s366, %s353, 128, 128, 8
        $region20: #{tpu_custom_call.1} parent=15 // pred_fallthru
          _
        // Predicated region
        $region21: #{tpu_custom_call.1} parent=15 // pred_check
          %p372 = pneg %p100
        $region22: #{tpu_custom_call.1} parent=15 // pred_check_branch
          %374 = sbr.rel (%p372) target = $region24
        $region23: #{tpu_custom_call.1} parent=15 // pred_region
          %s375 = sand.u32 %s31, 1
          %s376 = scalar_lea.sflag [#allocation8], %s375
          %s377 = sand.u32 %s90, 1
          %s378 = smul.addr %s377, 128
          %s379 = scalar_lea.vmem [#allocation7], %s378
          %s381 = ssub.s32 2048, 2048
          %382 = vsyncadd %s376, %s381
          %s383 = smul.addr %s38, 32
          %s384 = sadd.s32 %s40, %s383
          %s385 = smul.addr %s384, 128
          %s386 = scalar_lea.hbm %s1, %s385
          %s387 = sshll.u32 %s379, 4
          %s388 = int_to_ptr.vmem [resolvable:$true] %s387
          %393 = dma.hbm_to_vmem [thread:$0]  %s386, 2048, %s388, %s376, 256, 128, 8
        $region24: #{tpu_custom_call.1} parent=15 // pred_fallthru
          _
        // Predicated region
        $region25: #{tpu_custom_call.1} parent=15 // pred_check
          %p394 = pneg %p128
        $region26: #{tpu_custom_call.1} parent=15 // pred_check_branch
          %396 = sbr.rel (%p394) target = $region28
        $region27: #{tpu_custom_call.1} parent=15 // pred_region
          %s397 = sand.u32 %s31, 1
          %s398 = scalar_lea.sflag [#allocation8], %s397
          %s399 = sand.u32 %s118, 1
          %s400 = smul.addr %s399, 128
          %s401 = scalar_lea.vmem [#allocation9], %s400
          %s402 = smul.u32 16, %s40
          %s404 = ssub.s32 2048, 2048
          %405 = vsyncadd %s398, %s404
          %s406 = smul.addr %s38, 32
          %s407 = sadd.s32 %s402, %s406
          %s408 = smul.addr %s407, 128
          %s409 = scalar_lea.hbm %s2, %s408
          %s410 = sshll.u32 %s401, 4
          %s411 = int_to_ptr.vmem [resolvable:$true] %s410
          %416 = dma.hbm_to_vmem [thread:$0]  %s409, 2048, %s411, %s398, 128, 128, 8
        $region28: #{tpu_custom_call.1} parent=15 // pred_fallthru
          _
        // Predicated region
        $region29: #{tpu_custom_call.1} parent=15 // pred_check
          %p417 = pneg %p154
        $region30: #{tpu_custom_call.1} parent=15 // pred_check_branch
          %419 = sbr.rel (%p417) target = $region32
        $region31: #{tpu_custom_call.1} parent=15 // pred_region
          %s420 = sand.u32 %s144, 1
          %s421 = scalar_lea.sflag [#allocation11], %s420
          %s422 = sand.u32 %s144, 1
          %s423 = scalar_lea.vmem [#allocation10], %s422
          %s425 = ssub.s32 16, 16
          %426 = vsyncadd %s421, %s425
          %s427 = smul.addr %s38, 16
          %s428 = scalar_lea.hbm %s3, %s427
          %s430 = sshll.u32 %s423, 4
          %s431 = int_to_ptr.vmem [resolvable:$true] %s430
          %433 = dma.hbm_to_vmem [thread:$0]  %s428, 16, %s431, %s421
        $region32: #{tpu_custom_call.1} parent=15 // pred_fallthru
          _
        // Predicated region
        $region33: #{tpu_custom_call.1} parent=15 // pred_check
          %p434 = pneg %p182
        $region34: #{tpu_custom_call.1} parent=15 // pred_check_branch
          %436 = sbr.rel (%p434) target = $region36
        $region35: #{tpu_custom_call.1} parent=15 // pred_region
          %p437 = scmp.lt.s32.totalorder %s38, 1
          %s438 = scalar_select %p437, %s38, 1
          %p439 = scmp.lt.s32.totalorder %s40, 1
          %s440 = scalar_select %p439, %s40, 1
          %s441 = smul.addr %s438, 2
          %s442 = sadd.s32 %s440, %s441
          %s443 = scalar_lea.vmem %s4, %s442
        $region36: #{tpu_custom_call.1} parent=15 // pred_fallthru
          _
        // Predicated region
        $region37: #{tpu_custom_call.1} parent=15 // pred_check
          %p444 = pneg %p210
        $region38: #{tpu_custom_call.1} parent=15 // pred_check_branch
          %446 = sbr.rel (%p444) target = $region40
        $region39: #{tpu_custom_call.1} parent=15 // pred_region
          %p447 = scmp.lt.s32.totalorder %s38, 1
          %s448 = scalar_select %p447, %s38, 1
          %p449 = scmp.lt.s32.totalorder %s40, 1
          %s450 = scalar_select %p449, %s40, 1
          %s451 = smul.addr %s448, 2
          %s452 = sadd.s32 %s450, %s451
          %s453 = scalar_lea.vmem %s5, %s452
        $region40: #{tpu_custom_call.1} parent=15 // pred_fallthru
          _
      $region16: #{tpu_custom_call.1} parent=5 // pred_fallthru
        _
      %p454 = scmp.le.s32.totalorder 1, %s31
      %p455 = scmp.lt.s32.totalorder %s31, 9
      %p456 = pnand %p454, %p455
      %p457 = pneg %p456
      // Predicated region
      $region41: #{tpu_custom_call.1} parent=5 // pred_check
        _
      $region42: #{tpu_custom_call.1} parent=5 // pred_check_branch
        %459 = sbr.rel (%p456) target = $region44
      $region43: #{tpu_custom_call.1} parent=5 // pred_region
        %s460 = ssub.s32 %s31, 1
        %s461 = sand.u32 %s65, 1
        %s462 = scalar_lea.sflag [#allocation5], %s461
        %s463 = sand.u32 %s65, 1
        %s464 = smul.addr %s463, 128
        %s465 = scalar_lea.vmem [#allocation4], %s464
        // Predicated region
        $region45: #{tpu_custom_call.1} parent=43 // pred_check
          %p466 = pneg %p78
        $region46: #{tpu_custom_call.1} parent=43 // pred_check_branch
          %468 = sbr.rel (%p466) target = $region48
        $region47: #{tpu_custom_call.1} parent=43 // pred_region
          %469 = dma.done %s462, 2048
        $region48: #{tpu_custom_call.1} parent=43 // pred_fallthru
          _
        %s470 = sand.u32 %s36, 1
        %s471 = scalar_lea.sflag [#allocation8], %s470
        %s472 = sand.u32 %s93, 1
        %s473 = smul.addr %s472, 128
        %s474 = scalar_lea.vmem [#allocation7], %s473
        // Predicated region
        $region49: #{tpu_custom_call.1} parent=43 // pred_check
          %p475 = pneg %p106
        $region50: #{tpu_custom_call.1} parent=43 // pred_check_branch
          %477 = sbr.rel (%p475) target = $region52
        $region51: #{tpu_custom_call.1} parent=43 // pred_region
          %478 = dma.done %s471, 2048
        $region52: #{tpu_custom_call.1} parent=43 // pred_fallthru
          _
        %s479 = sand.u32 %s36, 1
        %s480 = scalar_lea.sflag [#allocation8], %s479
        %s481 = sand.u32 %s121, 1
        %s482 = smul.addr %s481, 128
        %s483 = scalar_lea.vmem [#allocation9], %s482
        // Predicated region
        $region53: #{tpu_custom_call.1} parent=43 // pred_check
          %p484 = pneg %p134
        $region54: #{tpu_custom_call.1} parent=43 // pred_check_branch
          %486 = sbr.rel (%p484) target = $region56
        $region55: #{tpu_custom_call.1} parent=43 // pred_region
          %487 = dma.done %s480, 2048
        $region56: #{tpu_custom_call.1} parent=43 // pred_fallthru
          _
        %s488 = sand.u32 %s147, 1
        %s489 = scalar_lea.sflag [#allocation11], %s488
        %s490 = sand.u32 %s147, 1
        %s491 = scalar_lea.vmem [#allocation10], %s490
        // Predicated region
        $region57: #{tpu_custom_call.1} parent=43 // pred_check
          %p492 = pneg %p160
        $region58: #{tpu_custom_call.1} parent=43 // pred_check_branch
          %494 = sbr.rel (%p492) target = $region60
        $region59: #{tpu_custom_call.1} parent=43 // pred_region
          %495 = dma.done %s489, 16
        $region60: #{tpu_custom_call.1} parent=43 // pred_fallthru
          _
        %s496 = sand.u32 %s65, 1
        %s497 = scalar_lea.sflag [#allocation5], %s496
        %s498 = sand.u32 %s65, 1
        %s499 = smul.addr %s498, 128
        %s500 = scalar_lea.vmem [#allocation4], %s499
        %p501 = pneg %p78
        %p502 = pneg %p75
        %s503 = sand.u32 %s36, 1
        %s504 = scalar_lea.sflag [#allocation8], %s503
        %s505 = sand.u32 %s93, 1
        %s506 = smul.addr %s505, 128
        %s507 = scalar_lea.vmem [#allocation7], %s506
        %p508 = pneg %p106
        %p509 = pneg %p103
        %s510 = sand.u32 %s36, 1
        %s511 = scalar_lea.sflag [#allocation8], %s510
        %s512 = sand.u32 %s121, 1
        %s513 = smul.addr %s512, 128
        %s514 = scalar_lea.vmem [#allocation9], %s513
        %p515 = pneg %p134
        %p516 = pneg %p131
        %s517 = sand.u32 %s147, 1
        %s518 = scalar_lea.sflag [#allocation11], %s517
        %s519 = sand.u32 %s147, 1
        %s520 = scalar_lea.vmem [#allocation10], %s519
        %p521 = pneg %p160
        %p522 = pneg %p157
        %p523 = scmp.lt.s32.totalorder %s41, 1
        %s524 = scalar_select %p523, %s41, 1
        %p525 = scmp.lt.s32.totalorder %s43, 1
        %s526 = scalar_select %p525, %s43, 1
        %s527 = smul.addr %s524, 2
        %s528 = sadd.s32 %s526, %s527
        %s529 = scalar_lea.vmem %s4, %s528
        %p530 = pneg %p188
        %p531 = pneg %p185
        %p532 = scmp.lt.s32.totalorder %s41, 1
        %s533 = scalar_select %p532, %s41, 1
        %p534 = scmp.lt.s32.totalorder %s43, 1
        %s535 = scalar_select %p534, %s43, 1
        %s536 = smul.addr %s533, 2
        %s537 = sadd.s32 %s535, %s536
        %s538 = scalar_lea.vmem %s5, %s537
        %p539 = pneg %p216
        %p540 = pneg %p213
        %p541 = pneg %p246
        %p542 = pneg %p243
        %s543 = sand.u32 %s233, 1
        %s544 = scalar_lea.sflag [#allocation6], %s543
        %s545 = sand.u32 %s233, 1
        %s546 = smul.addr %s545, 128
        %s547 = scalar_lea.vmem [#allocation12], %s546
        %p548 = pneg %p274
        %p549 = pneg %p271
        %s550 = sand.u32 %s261, 1
        %s551 = scalar_lea.sflag [#allocation14], %s550
        %s552 = sand.u32 %s261, 1
        %s553 = smul.addr %s552, 128
        %s554 = scalar_lea.vmem [#allocation13], %s553
        %p555 = pneg %p302
        %p556 = pneg %p299
        %s557 = smul.u32 16, %s42
        %p558 = scmp.lt.s32.totalorder %s41, 1
        %s559 = scalar_select %p558, %s41, 1
        %p560 = scmp.lt.s32.totalorder %s557, 31
        %s561 = scalar_select %p560, %s557, 31
        %s562 = smul.addr %s559, 32
        %s563 = sadd.s32 %s561, %s562
        %s564 = smul.addr %s563, 8
        %s565 = scalar_lea.vmem %s8, %s564
        %p566 = pneg %p330
        %p567 = pneg %p327
        %s568 = smul.u32 16, %s42
        %p569 = scmp.lt.s32.totalorder %s41, 1
        %s570 = scalar_select %p569, %s41, 1
        %p571 = scmp.lt.s32.totalorder %s568, 31
        %s572 = scalar_select %p571, %s568, 31
        %s573 = smul.addr %s570, 32
        %s574 = sadd.s32 %s572, %s573
        %s575 = smul.addr %s574, 8
        %s576 = scalar_lea.vmem %s9, %s575
        %s577 = smul.u32 16, %s42
        %s578 = smul.u32 16, %s43
        %p579 = scmp.lt.s32.totalorder %s41, 1
        %s580 = scalar_select %p579, %s41, 1
        %p581 = scmp.lt.s32.totalorder %s43, 1
        %s582 = scalar_select %p581, %s43, 1
        %s583 = smul.addr %s580, 2
        %s584 = sadd.s32 %s582, %s583
        %s585 = scalar_lea.vmem %s4, %s584
        %p586 = scmp.lt.s32.totalorder %s41, 1
        %s587 = scalar_select %p586, %s41, 1
        %p588 = scmp.lt.s32.totalorder %s43, 1
        %s589 = scalar_select %p588, %s43, 1
        %s590 = smul.addr %s587, 2
        %s591 = sadd.s32 %s589, %s590
        %s592 = scalar_lea.vmem %s5, %s591
        %s593 = smul.u32 16, %s42
        %s594 = smul.u32 16, %s42
        %s595 = smul.u32 16, %s42
        %p596 = scmp.lt.s32.totalorder %s41, 1
        %s597 = scalar_select %p596, %s41, 1
        %p598 = scmp.lt.s32.totalorder %s595, 31
        %s599 = scalar_select %p598, %s595, 31
        %s600 = smul.addr %s597, 32
        %s601 = sadd.s32 %s599, %s600
        %s602 = smul.addr %s601, 8
        %s603 = scalar_lea.vmem %s8, %s602
        %s604 = smul.u32 16, %s42
        %s605 = smul.u32 16, %s42
        %p606 = scmp.lt.s32.totalorder %s41, 1
        %s607 = scalar_select %p606, %s41, 1
        %p608 = scmp.lt.s32.totalorder %s605, 31
        %s609 = scalar_select %p608, %s605, 31
        %s610 = smul.addr %s607, 32
        %s611 = sadd.s32 %s609, %s610
        %s612 = smul.addr %s611, 8
        %s613 = scalar_lea.vmem %s9, %s612
        %s614 = smul.u32 16, %s42
        %v615 = vld [vmem:[%s465] sm:$0xff]
        %v616 = vld [vmem:[%s465 + $0x8] sm:$0xff]
        %v617 = vld [vmem:[%s465 + $0x10] sm:$0xff]
        %v618 = vld [vmem:[%s465 + $0x18] sm:$0xff]
        %v619 = vld [vmem:[%s465 + $0x20] sm:$0xff]
        %v620 = vld [vmem:[%s465 + $0x28] sm:$0xff]
        %v621 = vld [vmem:[%s465 + $0x30] sm:$0xff]
        %v622 = vld [vmem:[%s465 + $0x38] sm:$0xff]
        %v623 = vld [vmem:[%s465 + $0x40] sm:$0xff]
        %v624 = vld [vmem:[%s465 + $0x48] sm:$0xff]
        %v625 = vld [vmem:[%s465 + $0x50] sm:$0xff]
        %v626 = vld [vmem:[%s465 + $0x58] sm:$0xff]
        %v627 = vld [vmem:[%s465 + $0x60] sm:$0xff]
        %v628 = vld [vmem:[%s465 + $0x68] sm:$0xff]
        %v629 = vld [vmem:[%s465 + $0x70] sm:$0xff]
        %v630 = vld [vmem:[%s465 + $0x78] sm:$0xff]
        %v631 = vld [vmem:[%s474] sm:$0xff]
        %v632 = vld [vmem:[%s474 + $0x8] sm:$0xff]
        %v633 = vld [vmem:[%s474 + $0x10] sm:$0xff]
        %v634 = vld [vmem:[%s474 + $0x18] sm:$0xff]
        %v635 = vld [vmem:[%s474 + $0x20] sm:$0xff]
        %v636 = vld [vmem:[%s474 + $0x28] sm:$0xff]
        %v637 = vld [vmem:[%s474 + $0x30] sm:$0xff]
        %v638 = vld [vmem:[%s474 + $0x38] sm:$0xff]
        %v639 = vld [vmem:[%s474 + $0x40] sm:$0xff]
        %v640 = vld [vmem:[%s474 + $0x48] sm:$0xff]
        %v641 = vld [vmem:[%s474 + $0x50] sm:$0xff]
        %v642 = vld [vmem:[%s474 + $0x58] sm:$0xff]
        %v643 = vld [vmem:[%s474 + $0x60] sm:$0xff]
        %v644 = vld [vmem:[%s474 + $0x68] sm:$0xff]
        %v645 = vld [vmem:[%s474 + $0x70] sm:$0xff]
        %v646 = vld [vmem:[%s474 + $0x78] sm:$0xff]
        %v647 = vld [vmem:[%s483] sm:$0xff]
        %v648 = vld [vmem:[%s483 + $0x8] sm:$0xff]
        %v649 = vld [vmem:[%s483 + $0x10] sm:$0xff]
        %v650 = vld [vmem:[%s483 + $0x18] sm:$0xff]
        %v651 = vld [vmem:[%s483 + $0x20] sm:$0xff]
        %v652 = vld [vmem:[%s483 + $0x28] sm:$0xff]
        %v653 = vld [vmem:[%s483 + $0x30] sm:$0xff]
        %v654 = vld [vmem:[%s483 + $0x38] sm:$0xff]
        %v655 = vld [vmem:[%s483 + $0x40] sm:$0xff]
        %v656 = vld [vmem:[%s483 + $0x48] sm:$0xff]
        %v657 = vld [vmem:[%s483 + $0x50] sm:$0xff]
        %v658 = vld [vmem:[%s483 + $0x58] sm:$0xff]
        %v659 = vld [vmem:[%s483 + $0x60] sm:$0xff]
        %v660 = vld [vmem:[%s483 + $0x68] sm:$0xff]
        %v661 = vld [vmem:[%s483 + $0x70] sm:$0xff]
        %v662 = vld [vmem:[%s483 + $0x78] sm:$0xff]
        %v663 = vld [vmem:[%s491] sm:$0x1]
        %v664 = vld [vmem:[%s585] sm:$0x1]
        %v665 = vld [vmem:[%s592] sm:$0x1]
        %p666 = scmp.eq.s32.totalorder %s43, 0
        // Predicated region
        $region61: #{tpu_custom_call.1} parent=43 // pred_check
          %p667 = pneg %p666
        $region62: #{tpu_custom_call.1} parent=43 // pred_check_branch
          %669 = sbr.rel (%p667) target = $region64
        $region63: #{tpu_custom_call.1} parent=43 // pred_region
          %670 = vst [vmem:[#allocation2] sm:$0xff] 0.0
          %671 = vst [vmem:[#allocation2 + $0x8] sm:$0xff] 0.0
          %672 = vst [vmem:[#allocation2 + $0x10] sm:$0xff] 0.0
          %673 = vst [vmem:[#allocation2 + $0x18] sm:$0xff] 0.0
          %674 = vst [vmem:[#allocation2 + $0x20] sm:$0xff] 0.0
          %675 = vst [vmem:[#allocation2 + $0x28] sm:$0xff] 0.0
          %676 = vst [vmem:[#allocation2 + $0x30] sm:$0xff] 0.0
          %677 = vst [vmem:[#allocation2 + $0x38] sm:$0xff] 0.0
          %678 = vst [vmem:[#allocation2 + $0x40] sm:$0xff] 0.0
          %679 = vst [vmem:[#allocation2 + $0x48] sm:$0xff] 0.0
          %680 = vst [vmem:[#allocation2 + $0x50] sm:$0xff] 0.0
          %681 = vst [vmem:[#allocation2 + $0x58] sm:$0xff] 0.0
          %682 = vst [vmem:[#allocation2 + $0x60] sm:$0xff] 0.0
          %683 = vst [vmem:[#allocation2 + $0x68] sm:$0xff] 0.0
          %684 = vst [vmem:[#allocation2 + $0x70] sm:$0xff] 0.0
          %685 = vst [vmem:[#allocation2 + $0x78] sm:$0xff] 0.0
          %vm686 = vcmask 7168
          %687 = vst.msk [vmem:[#allocation3] sm:$0xff] %vm686, 0.0
          %688 = vst.msk [vmem:[#allocation3 + $0x8] sm:$0xff] %vm686, 0.0
          %689 = vst.msk [vmem:[#allocation3 + $0x10] sm:$0xff] %vm686, 0.0
          %690 = vst.msk [vmem:[#allocation3 + $0x18] sm:$0xff] %vm686, 0.0
          %691 = vst.msk [vmem:[#allocation3 + $0x20] sm:$0xff] %vm686, 0.0
          %692 = vst.msk [vmem:[#allocation3 + $0x28] sm:$0xff] %vm686, 0.0
          %693 = vst.msk [vmem:[#allocation3 + $0x30] sm:$0xff] %vm686, 0.0
          %694 = vst.msk [vmem:[#allocation3 + $0x38] sm:$0xff] %vm686, 0.0
          %695 = vst.msk [vmem:[#allocation3 + $0x40] sm:$0xff] %vm686, 0.0
          %696 = vst.msk [vmem:[#allocation3 + $0x48] sm:$0xff] %vm686, 0.0
          %697 = vst.msk [vmem:[#allocation3 + $0x50] sm:$0xff] %vm686, 0.0
          %698 = vst.msk [vmem:[#allocation3 + $0x58] sm:$0xff] %vm686, 0.0
          %699 = vst.msk [vmem:[#allocation3 + $0x60] sm:$0xff] %vm686, 0.0
          %700 = vst.msk [vmem:[#allocation3 + $0x68] sm:$0xff] %vm686, 0.0
          %701 = vst.msk [vmem:[#allocation3 + $0x70] sm:$0xff] %vm686, 0.0
          %702 = vst.msk [vmem:[#allocation3 + $0x78] sm:$0xff] %vm686, 0.0
        $region64: #{tpu_custom_call.1} parent=43 // pred_fallthru
          _
        %v704 = vlaneseq
        %v705 = vshrl.u32 %v704, 7
        %v706 = vsub.s32 0, %v705
        %v707 = vrot.slane %v663, %v706
        %v709 = vsub.f32 %v615, %v707
        %v710 = vsub.f32 %v616, %v707
        %v711 = vsub.f32 %v617, %v707
        %v712 = vsub.f32 %v618, %v707
        %v713 = vsub.f32 %v619, %v707
        %v714 = vsub.f32 %v620, %v707
        %v715 = vsub.f32 %v621, %v707
        %v716 = vsub.f32 %v622, %v707
        %v717 = vsub.f32 %v623, %v707
        %v718 = vsub.f32 %v624, %v707
        %v719 = vsub.f32 %v625, %v707
        %v720 = vsub.f32 %v626, %v707
        %v721 = vsub.f32 %v627, %v707
        %v722 = vsub.f32 %v628, %v707
        %v723 = vsub.f32 %v629, %v707
        %v724 = vsub.f32 %v630, %v707
        %v726 = vlaneseq
        %v727 = vshrl.u32 %v726, 7
        %v728 = vsub.s32 0, %v727
        %v729 = vrot.slane %v664, %v728
        %731 = vmatprep.subr.mxu0 0.0
        %732 = vmatpush1.msra.mxu0 %v646
        %733 = vmatprep.subr.mxu0 0.0
        %734 = vmatpush1.msra.mxu0 %v645
        %735 = vmatprep.subr.mxu0 0.0
        %736 = vmatpush1.msra.mxu0 %v644
        %737 = vmatprep.subr.mxu0 0.0
        %738 = vmatpush1.msra.mxu0 %v643
        %739 = vmatprep.subr.mxu0 0.0
        %740 = vmatpush1.msra.mxu0 %v642
        %741 = vmatprep.subr.mxu0 0.0
        %742 = vmatpush1.msra.mxu0 %v641
        %743 = vmatprep.subr.mxu0 0.0
        %744 = vmatpush1.msra.mxu0 %v640
        %745 = vmatprep.subr.mxu0 0.0
        %746 = vmatpush1.msra.mxu0 %v639
        %747 = vmatprep.subr.mxu0 0.0
        %748 = vmatpush1.msra.mxu0 %v638
        %749 = vmatprep.subr.mxu0 0.0
        %750 = vmatpush1.msra.mxu0 %v637
        %751 = vmatprep.subr.mxu0 0.0
        %752 = vmatpush1.msra.mxu0 %v636
        %753 = vmatprep.subr.mxu0 0.0
        %754 = vmatpush1.msra.mxu0 %v635
        %755 = vmatprep.subr.mxu0 0.0
        %756 = vmatpush1.msra.mxu0 %v634
        %757 = vmatprep.subr.mxu0 0.0
        %758 = vmatpush1.msra.mxu0 %v633
        %759 = vmatprep.subr.mxu0 0.0
        %760 = vmatpush1.msra.mxu0 %v632
        %761 = vmatprep.subr.mxu0 0.0
        %762 = vmatpush1.msra.mxu0 %v631
        %763 = vmatprep.subr.mxu0 0.0
        %764 = vmatpush2.msra.mxu0 0.0
        %765 = vmatprep.subr.mxu0 0.0
        %766 = vmatpush2.msra.mxu0 0.0
        %767 = vmatprep.subr.mxu0 0.0
        %768 = vmatpush2.msra.mxu0 0.0
        %769 = vmatprep.subr.mxu0 0.0
        %770 = vmatpush2.msra.mxu0 0.0
        %771 = vmatprep.subr.mxu0 0.0
        %772 = vmatpush2.msra.mxu0 0.0
        %773 = vmatprep.subr.mxu0 0.0
        %774 = vmatpush2.msra.mxu0 0.0
        %775 = vmatprep.subr.mxu0 0.0
        %776 = vmatpush2.msra.mxu0 0.0
        %777 = vmatprep.subr.mxu0 0.0
        %778 = vmatpush2.msra.mxu0 0.0
        %779 = vmatprep.subr.mxu0 0.0
        %780 = vmatpush2.msra.mxu0 0.0
        %781 = vmatprep.subr.mxu0 0.0
        %782 = vmatpush2.msra.mxu0 0.0
        %783 = vmatprep.subr.mxu0 0.0
        %784 = vmatpush2.msra.mxu0 0.0
        %785 = vmatprep.subr.mxu0 0.0
        %786 = vmatpush2.msra.mxu0 0.0
        %787 = vmatprep.subr.mxu0 0.0
        %788 = vmatpush2.msra.mxu0 0.0
        %789 = vmatprep.subr.mxu0 0.0
        %790 = vmatpush2.msra.mxu0 0.0
        %791 = vmatprep.subr.mxu0 0.0
        %792 = vmatpush2.msra.mxu0 0.0
        %793 = vmatprep.subr.mxu0 0.0
        %794 = vmatpush2.msra.mxu0 0.0
        %795 = vmatprep.mubr.f32.mxu0 0.0
        %796 = vmatmul.mubr.f32.gmra.mxu0 %v709
        %v797 = vpop.f32.mrf.mxu0
        %v798 = vadd.f32 %v729, %v797
        %v799 = vpop.f32.mrf.mxu0
        %800 = vmatprep.mubr.f32.mxu0 0.0
        %801 = vmatmul.mubr.f32.gmra.mxu0 %v710
        %v802 = vpop.f32.mrf.mxu0
        %v803 = vadd.f32 %v729, %v802
        %v804 = vpop.f32.mrf.mxu0
        %805 = vmatprep.mubr.f32.mxu0 0.0
        %806 = vmatmul.mubr.f32.gmra.mxu0 %v711
        %v807 = vpop.f32.mrf.mxu0
        %v808 = vadd.f32 %v729, %v807
        %v809 = vpop.f32.mrf.mxu0
        %810 = vmatprep.mubr.f32.mxu0 0.0
        %811 = vmatmul.mubr.f32.gmra.mxu0 %v712
        %v812 = vpop.f32.mrf.mxu0
        %v813 = vadd.f32 %v729, %v812
        %v814 = vpop.f32.mrf.mxu0
        %815 = vmatprep.mubr.f32.mxu0 0.0
        %816 = vmatmul.mubr.f32.gmra.mxu0 %v713
        %v817 = vpop.f32.mrf.mxu0
        %v818 = vadd.f32 %v729, %v817
        %v819 = vpop.f32.mrf.mxu0
        %820 = vmatprep.mubr.f32.mxu0 0.0
        %821 = vmatmul.mubr.f32.gmra.mxu0 %v714
        %v822 = vpop.f32.mrf.mxu0
        %v823 = vadd.f32 %v729, %v822
        %v824 = vpop.f32.mrf.mxu0
        %825 = vmatprep.mubr.f32.mxu0 0.0
        %826 = vmatmul.mubr.f32.gmra.mxu0 %v715
        %v827 = vpop.f32.mrf.mxu0
        %v828 = vadd.f32 %v729, %v827
        %v829 = vpop.f32.mrf.mxu0
        %830 = vmatprep.mubr.f32.mxu0 0.0
        %831 = vmatmul.mubr.f32.gmra.mxu0 %v716
        %v832 = vpop.f32.mrf.mxu0
        %v833 = vadd.f32 %v729, %v832
        %v834 = vpop.f32.mrf.mxu0
        %835 = vmatprep.mubr.f32.mxu0 0.0
        %836 = vmatmul.mubr.f32.gmra.mxu0 %v717
        %v837 = vpop.f32.mrf.mxu0
        %v838 = vadd.f32 %v729, %v837
        %v839 = vpop.f32.mrf.mxu0
        %840 = vmatprep.mubr.f32.mxu0 0.0
        %841 = vmatmul.mubr.f32.gmra.mxu0 %v718
        %v842 = vpop.f32.mrf.mxu0
        %v843 = vadd.f32 %v729, %v842
        %v844 = vpop.f32.mrf.mxu0
        %845 = vmatprep.mubr.f32.mxu0 0.0
        %846 = vmatmul.mubr.f32.gmra.mxu0 %v719
        %v847 = vpop.f32.mrf.mxu0
        %v848 = vadd.f32 %v729, %v847
        %v849 = vpop.f32.mrf.mxu0
        %850 = vmatprep.mubr.f32.mxu0 0.0
        %851 = vmatmul.mubr.f32.gmra.mxu0 %v720
        %v852 = vpop.f32.mrf.mxu0
        %v853 = vadd.f32 %v729, %v852
        %v854 = vpop.f32.mrf.mxu0
        %855 = vmatprep.mubr.f32.mxu0 0.0
        %856 = vmatmul.mubr.f32.gmra.mxu0 %v721
        %v857 = vpop.f32.mrf.mxu0
        %v858 = vadd.f32 %v729, %v857
        %v859 = vpop.f32.mrf.mxu0
        %860 = vmatprep.mubr.f32.mxu0 0.0
        %861 = vmatmul.mubr.f32.gmra.mxu0 %v722
        %v862 = vpop.f32.mrf.mxu0
        %v863 = vadd.f32 %v729, %v862
        %v864 = vpop.f32.mrf.mxu0
        %865 = vmatprep.mubr.f32.mxu0 0.0
        %866 = vmatmul.mubr.f32.gmra.mxu0 %v723
        %v867 = vpop.f32.mrf.mxu0
        %v868 = vadd.f32 %v729, %v867
        %v869 = vpop.f32.mrf.mxu0
        %870 = vmatprep.mubr.f32.mxu0 0.0
        %871 = vmatmul.mubr.f32.gmra.mxu0 %v724
        %v872 = vpop.f32.mrf.mxu0
        %v873 = vadd.f32 %v729, %v872
        %v874 = vpop.f32.mrf.mxu0
        %875 = vdwg.mxu0
        %v876 = vmax.f32 %v798, 0.0
        %v877 = vmax.f32 %v803, 0.0
        %v878 = vmax.f32 %v808, 0.0
        %v879 = vmax.f32 %v813, 0.0
        %v880 = vmax.f32 %v818, 0.0
        %v881 = vmax.f32 %v823, 0.0
        %v882 = vmax.f32 %v828, 0.0
        %v883 = vmax.f32 %v833, 0.0
        %v884 = vmax.f32 %v838, 0.0
        %v885 = vmax.f32 %v843, 0.0
        %v886 = vmax.f32 %v848, 0.0
        %v887 = vmax.f32 %v853, 0.0
        %v888 = vmax.f32 %v858, 0.0
        %v889 = vmax.f32 %v863, 0.0
        %v890 = vmax.f32 %v868, 0.0
        %v891 = vmax.f32 %v873, 0.0
        %v893 = vlaneseq
        %v894 = vshrl.u32 %v893, 7
        %v895 = vsub.s32 0, %v894
        %v896 = vrot.slane %v665, %v895
        %vm898 = vcmp.gt.f32.partialorder %v876, %v896
        %vm899 = vcmp.gt.f32.partialorder %v877, %v896
        %vm900 = vcmp.gt.f32.partialorder %v878, %v896
        %vm901 = vcmp.gt.f32.partialorder %v879, %v896
        %vm902 = vcmp.gt.f32.partialorder %v880, %v896
        %vm903 = vcmp.gt.f32.partialorder %v881, %v896
        %vm904 = vcmp.gt.f32.partialorder %v882, %v896
        %vm905 = vcmp.gt.f32.partialorder %v883, %v896
        %vm906 = vcmp.gt.f32.partialorder %v884, %v896
        %vm907 = vcmp.gt.f32.partialorder %v885, %v896
        %vm908 = vcmp.gt.f32.partialorder %v886, %v896
        %vm909 = vcmp.gt.f32.partialorder %v887, %v896
        %vm910 = vcmp.gt.f32.partialorder %v888, %v896
        %vm911 = vcmp.gt.f32.partialorder %v889, %v896
        %vm912 = vcmp.gt.f32.partialorder %v890, %v896
        %vm913 = vcmp.gt.f32.partialorder %v891, %v896
        %v914 = vsel %vm898, 1, 0
        %v915 = vsel %vm899, 1, 0
        %v916 = vsel %vm900, 1, 0
        %v917 = vsel %vm901, 1, 0
        %v918 = vsel %vm902, 1, 0
        %v919 = vsel %vm903, 1, 0
        %v920 = vsel %vm904, 1, 0
        %v921 = vsel %vm905, 1, 0
        %v922 = vsel %vm906, 1, 0
        %v923 = vsel %vm907, 1, 0
        %v924 = vsel %vm908, 1, 0
        %v925 = vsel %vm909, 1, 0
        %v926 = vsel %vm910, 1, 0
        %v927 = vsel %vm911, 1, 0
        %v928 = vsel %vm912, 1, 0
        %v929 = vsel %vm913, 1, 0
        %v930 = vcvt.s32.f32 %v914
        %v931 = vcvt.s32.f32 %v915
        %v932 = vcvt.s32.f32 %v916
        %v933 = vcvt.s32.f32 %v917
        %v934 = vcvt.s32.f32 %v918
        %v935 = vcvt.s32.f32 %v919
        %v936 = vcvt.s32.f32 %v920
        %v937 = vcvt.s32.f32 %v921
        %v938 = vcvt.s32.f32 %v922
        %v939 = vcvt.s32.f32 %v923
        %v940 = vcvt.s32.f32 %v924
        %v941 = vcvt.s32.f32 %v925
        %v942 = vcvt.s32.f32 %v926
        %v943 = vcvt.s32.f32 %v927
        %v944 = vcvt.s32.f32 %v928
        %v945 = vcvt.s32.f32 %v929
        %v946 = vmul.f32 %v876, %v930
        %v947 = vmul.f32 %v877, %v931
        %v948 = vmul.f32 %v878, %v932
        %v949 = vmul.f32 %v879, %v933
        %v950 = vmul.f32 %v880, %v934
        %v951 = vmul.f32 %v881, %v935
        %v952 = vmul.f32 %v882, %v936
        %v953 = vmul.f32 %v883, %v937
        %v954 = vmul.f32 %v884, %v938
        %v955 = vmul.f32 %v885, %v939
        %v956 = vmul.f32 %v886, %v940
        %v957 = vmul.f32 %v887, %v941
        %v958 = vmul.f32 %v888, %v942
        %v959 = vmul.f32 %v889, %v943
        %v960 = vmul.f32 %v890, %v944
        %v961 = vmul.f32 %v891, %v945
        %962 = vst [vmem:[%s547] sm:$0xff] %v946
        %963 = vst [vmem:[%s547 + $0x8] sm:$0xff] %v947
        %964 = vst [vmem:[%s547 + $0x10] sm:$0xff] %v948
        %965 = vst [vmem:[%s547 + $0x18] sm:$0xff] %v949
        %966 = vst [vmem:[%s547 + $0x20] sm:$0xff] %v950
        %967 = vst [vmem:[%s547 + $0x28] sm:$0xff] %v951
        %968 = vst [vmem:[%s547 + $0x30] sm:$0xff] %v952
        %969 = vst [vmem:[%s547 + $0x38] sm:$0xff] %v953
        %970 = vst [vmem:[%s547 + $0x40] sm:$0xff] %v954
        %971 = vst [vmem:[%s547 + $0x48] sm:$0xff] %v955
        %972 = vst [vmem:[%s547 + $0x50] sm:$0xff] %v956
        %973 = vst [vmem:[%s547 + $0x58] sm:$0xff] %v957
        %974 = vst [vmem:[%s547 + $0x60] sm:$0xff] %v958
        %975 = vst [vmem:[%s547 + $0x68] sm:$0xff] %v959
        %976 = vst [vmem:[%s547 + $0x70] sm:$0xff] %v960
        %977 = vst [vmem:[%s547 + $0x78] sm:$0xff] %v961
        %v978 = vld [vmem:[#allocation2] sm:$0xff]
        %v979 = vld [vmem:[#allocation2 + $0x8] sm:$0xff]
        %v980 = vld [vmem:[#allocation2 + $0x10] sm:$0xff]
        %v981 = vld [vmem:[#allocation2 + $0x18] sm:$0xff]
        %v982 = vld [vmem:[#allocation2 + $0x20] sm:$0xff]
        %v983 = vld [vmem:[#allocation2 + $0x28] sm:$0xff]
        %v984 = vld [vmem:[#allocation2 + $0x30] sm:$0xff]
        %v985 = vld [vmem:[#allocation2 + $0x38] sm:$0xff]
        %v986 = vld [vmem:[#allocation2 + $0x40] sm:$0xff]
        %v987 = vld [vmem:[#allocation2 + $0x48] sm:$0xff]
        %v988 = vld [vmem:[#allocation2 + $0x50] sm:$0xff]
        %v989 = vld [vmem:[#allocation2 + $0x58] sm:$0xff]
        %v990 = vld [vmem:[#allocation2 + $0x60] sm:$0xff]
        %v991 = vld [vmem:[#allocation2 + $0x68] sm:$0xff]
        %v992 = vld [vmem:[#allocation2 + $0x70] sm:$0xff]
        %v993 = vld [vmem:[#allocation2 + $0x78] sm:$0xff]
        %994 = vmatprep.subr.mxu0 0.0
        %995 = vmatpush1.msra.mxu0 %v662
        %996 = vmatprep.subr.mxu0 0.0
        %997 = vmatpush1.msra.mxu0 %v661
        %998 = vmatprep.subr.mxu0 0.0
        %999 = vmatpush1.msra.mxu0 %v660
        %1000 = vmatprep.subr.mxu0 0.0
        %1001 = vmatpush1.msra.mxu0 %v659
        %1002 = vmatprep.subr.mxu0 0.0
        %1003 = vmatpush1.msra.mxu0 %v658
        %1004 = vmatprep.subr.mxu0 0.0
        %1005 = vmatpush1.msra.mxu0 %v657
        %1006 = vmatprep.subr.mxu0 0.0
        %1007 = vmatpush1.msra.mxu0 %v656
        %1008 = vmatprep.subr.mxu0 0.0
        %1009 = vmatpush1.msra.mxu0 %v655
        %1010 = vmatprep.subr.mxu0 0.0
        %1011 = vmatpush1.msra.mxu0 %v654
        %1012 = vmatprep.subr.mxu0 0.0
        %1013 = vmatpush1.msra.mxu0 %v653
        %1014 = vmatprep.subr.mxu0 0.0
        %1015 = vmatpush1.msra.mxu0 %v652
        %1016 = vmatprep.subr.mxu0 0.0
        %1017 = vmatpush1.msra.mxu0 %v651
        %1018 = vmatprep.subr.mxu0 0.0
        %1019 = vmatpush1.msra.mxu0 %v650
        %1020 = vmatprep.subr.mxu0 0.0
        %1021 = vmatpush1.msra.mxu0 %v649
        %1022 = vmatprep.subr.mxu0 0.0
        %1023 = vmatpush1.msra.mxu0 %v648
        %1024 = vmatprep.subr.mxu0 0.0
        %1025 = vmatpush1.msra.mxu0 %v647
        %1026 = vmatprep.subr.mxu0 0.0
        %1027 = vmatpush2.msra.mxu0 0.0
        %1028 = vmatprep.subr.mxu0 0.0
        %1029 = vmatpush2.msra.mxu0 0.0
        %1030 = vmatprep.subr.mxu0 0.0
        %1031 = vmatpush2.msra.mxu0 0.0
        %1032 = vmatprep.subr.mxu0 0.0
        %1033 = vmatpush2.msra.mxu0 0.0
        %1034 = vmatprep.subr.mxu0 0.0
        %1035 = vmatpush2.msra.mxu0 0.0
        %1036 = vmatprep.subr.mxu0 0.0
        %1037 = vmatpush2.msra.mxu0 0.0
        %1038 = vmatprep.subr.mxu0 0.0
        %1039 = vmatpush2.msra.mxu0 0.0
        %1040 = vmatprep.subr.mxu0 0.0
        %1041 = vmatpush2.msra.mxu0 0.0
        %1042 = vmatprep.subr.mxu0 0.0
        %1043 = vmatpush2.msra.mxu0 0.0
        %1044 = vmatprep.subr.mxu0 0.0
        %1045 = vmatpush2.msra.mxu0 0.0
        %1046 = vmatprep.subr.mxu0 0.0
        %1047 = vmatpush2.msra.mxu0 0.0
        %1048 = vmatprep.subr.mxu0 0.0
        %1049 = vmatpush2.msra.mxu0 0.0
        %1050 = vmatprep.subr.mxu0 0.0
        %1051 = vmatpush2.msra.mxu0 0.0
        %1052 = vmatprep.subr.mxu0 0.0
        %1053 = vmatpush2.msra.mxu0 0.0
        %1054 = vmatprep.subr.mxu0 0.0
        %1055 = vmatpush2.msra.mxu0 0.0
        %1056 = vmatprep.subr.mxu0 0.0
        %1057 = vmatpush2.msra.mxu0 0.0
        %1058 = vmatprep.mubr.f32.mxu0 0.0
        %1059 = vmatmul.mubr.f32.gmra.mxu0 %v946
        %v1060 = vpop.f32.mrf.mxu0
        %v1061 = vadd.f32 0.0, %v1060
        %v1062 = vpop.f32.mrf.mxu0
        %1063 = vmatprep.mubr.f32.mxu0 0.0
        %1064 = vmatmul.mubr.f32.gmra.mxu0 %v947
        %v1065 = vpop.f32.mrf.mxu0
        %v1066 = vadd.f32 0.0, %v1065
        %v1067 = vpop.f32.mrf.mxu0
        %1068 = vmatprep.mubr.f32.mxu0 0.0
        %1069 = vmatmul.mubr.f32.gmra.mxu0 %v948
        %v1070 = vpop.f32.mrf.mxu0
        %v1071 = vadd.f32 0.0, %v1070
        %v1072 = vpop.f32.mrf.mxu0
        %1073 = vmatprep.mubr.f32.mxu0 0.0
        %1074 = vmatmul.mubr.f32.gmra.mxu0 %v949
        %v1075 = vpop.f32.mrf.mxu0
        %v1076 = vadd.f32 0.0, %v1075
        %v1077 = vpop.f32.mrf.mxu0
        %1078 = vmatprep.mubr.f32.mxu0 0.0
        %1079 = vmatmul.mubr.f32.gmra.mxu0 %v950
        %v1080 = vpop.f32.mrf.mxu0
        %v1081 = vadd.f32 0.0, %v1080
        %v1082 = vpop.f32.mrf.mxu0
        %1083 = vmatprep.mubr.f32.mxu0 0.0
        %1084 = vmatmul.mubr.f32.gmra.mxu0 %v951
        %v1085 = vpop.f32.mrf.mxu0
        %v1086 = vadd.f32 0.0, %v1085
        %v1087 = vpop.f32.mrf.mxu0
        %1088 = vmatprep.mubr.f32.mxu0 0.0
        %1089 = vmatmul.mubr.f32.gmra.mxu0 %v952
        %v1090 = vpop.f32.mrf.mxu0
        %v1091 = vadd.f32 0.0, %v1090
        %v1092 = vpop.f32.mrf.mxu0
        %1093 = vmatprep.mubr.f32.mxu0 0.0
        %1094 = vmatmul.mubr.f32.gmra.mxu0 %v953
        %v1095 = vpop.f32.mrf.mxu0
        %v1096 = vadd.f32 0.0, %v1095
        %v1097 = vpop.f32.mrf.mxu0
        %1098 = vmatprep.mubr.f32.mxu0 0.0
        %1099 = vmatmul.mubr.f32.gmra.mxu0 %v954
        %v1100 = vpop.f32.mrf.mxu0
        %v1101 = vadd.f32 0.0, %v1100
        %v1102 = vpop.f32.mrf.mxu0
        %1103 = vmatprep.mubr.f32.mxu0 0.0
        %1104 = vmatmul.mubr.f32.gmra.mxu0 %v955
        %v1105 = vpop.f32.mrf.mxu0
        %v1106 = vadd.f32 0.0, %v1105
        %v1107 = vpop.f32.mrf.mxu0
        %1108 = vmatprep.mubr.f32.mxu0 0.0
        %1109 = vmatmul.mubr.f32.gmra.mxu0 %v956
        %v1110 = vpop.f32.mrf.mxu0
        %v1111 = vadd.f32 0.0, %v1110
        %v1112 = vpop.f32.mrf.mxu0
        %1113 = vmatprep.mubr.f32.mxu0 0.0
        %1114 = vmatmul.mubr.f32.gmra.mxu0 %v957
        %v1115 = vpop.f32.mrf.mxu0
        %v1116 = vadd.f32 0.0, %v1115
        %v1117 = vpop.f32.mrf.mxu0
        %1118 = vmatprep.mubr.f32.mxu0 0.0
        %1119 = vmatmul.mubr.f32.gmra.mxu0 %v958
        %v1120 = vpop.f32.mrf.mxu0
        %v1121 = vadd.f32 0.0, %v1120
        %v1122 = vpop.f32.mrf.mxu0
        %1123 = vmatprep.mubr.f32.mxu0 0.0
        %1124 = vmatmul.mubr.f32.gmra.mxu0 %v959
        %v1125 = vpop.f32.mrf.mxu0
        %v1126 = vadd.f32 0.0, %v1125
        %v1127 = vpop.f32.mrf.mxu0
        %1128 = vmatprep.mubr.f32.mxu0 0.0
        %1129 = vmatmul.mubr.f32.gmra.mxu0 %v960
        %v1130 = vpop.f32.mrf.mxu0
        %v1131 = vadd.f32 0.0, %v1130
        %v1132 = vpop.f32.mrf.mxu0
        %1133 = vmatprep.mubr.f32.mxu0 0.0
        %1134 = vmatmul.mubr.f32.gmra.mxu0 %v961
        %v1135 = vpop.f32.mrf.mxu0
        %v1136 = vadd.f32 0.0, %v1135
        %v1137 = vpop.f32.mrf.mxu0
        %1138 = vdwg.mxu0
        %v1139 = vadd.f32 %v978, %v1061
        %v1140 = vadd.f32 %v979, %v1066
        %v1141 = vadd.f32 %v980, %v1071
        %v1142 = vadd.f32 %v981, %v1076
        %v1143 = vadd.f32 %v982, %v1081
        %v1144 = vadd.f32 %v983, %v1086
        %v1145 = vadd.f32 %v984, %v1091
        %v1146 = vadd.f32 %v985, %v1096
        %v1147 = vadd.f32 %v986, %v1101
        %v1148 = vadd.f32 %v987, %v1106
        %v1149 = vadd.f32 %v988, %v1111
        %v1150 = vadd.f32 %v989, %v1116
        %v1151 = vadd.f32 %v990, %v1121
        %v1152 = vadd.f32 %v991, %v1126
        %v1153 = vadd.f32 %v992, %v1131
        %v1154 = vadd.f32 %v993, %v1136
        %1155 = vst [vmem:[#allocation2] sm:$0xff] %v1139
        %1156 = vst [vmem:[#allocation2 + $0x8] sm:$0xff] %v1140
        %1157 = vst [vmem:[#allocation2 + $0x10] sm:$0xff] %v1141
        %1158 = vst [vmem:[#allocation2 + $0x18] sm:$0xff] %v1142
        %1159 = vst [vmem:[#allocation2 + $0x20] sm:$0xff] %v1143
        %1160 = vst [vmem:[#allocation2 + $0x28] sm:$0xff] %v1144
        %1161 = vst [vmem:[#allocation2 + $0x30] sm:$0xff] %v1145
        %1162 = vst [vmem:[#allocation2 + $0x38] sm:$0xff] %v1146
        %1163 = vst [vmem:[#allocation2 + $0x40] sm:$0xff] %v1147
        %1164 = vst [vmem:[#allocation2 + $0x48] sm:$0xff] %v1148
        %1165 = vst [vmem:[#allocation2 + $0x50] sm:$0xff] %v1149
        %1166 = vst [vmem:[#allocation2 + $0x58] sm:$0xff] %v1150
        %1167 = vst [vmem:[#allocation2 + $0x60] sm:$0xff] %v1151
        %1168 = vst [vmem:[#allocation2 + $0x68] sm:$0xff] %v1152
        %1169 = vst [vmem:[#allocation2 + $0x70] sm:$0xff] %v1153
        %1170 = vst [vmem:[#allocation2 + $0x78] sm:$0xff] %v1154
        %v1171 = vld [vmem:[#allocation3] sm:$0xff]
        %v1172 = vld [vmem:[#allocation3 + $0x8] sm:$0xff]
        %v1173 = vld [vmem:[#allocation3 + $0x10] sm:$0xff]
        %v1174 = vld [vmem:[#allocation3 + $0x18] sm:$0xff]
        %v1175 = vld [vmem:[#allocation3 + $0x20] sm:$0xff]
        %v1176 = vld [vmem:[#allocation3 + $0x28] sm:$0xff]
        %v1177 = vld [vmem:[#allocation3 + $0x30] sm:$0xff]
        %v1178 = vld [vmem:[#allocation3 + $0x38] sm:$0xff]
        %v1179 = vld [vmem:[#allocation3 + $0x40] sm:$0xff]
        %v1180 = vld [vmem:[#allocation3 + $0x48] sm:$0xff]
        %v1181 = vld [vmem:[#allocation3 + $0x50] sm:$0xff]
        %v1182 = vld [vmem:[#allocation3 + $0x58] sm:$0xff]
        %v1183 = vld [vmem:[#allocation3 + $0x60] sm:$0xff]
        %v1184 = vld [vmem:[#allocation3 + $0x68] sm:$0xff]
        %v1185 = vld [vmem:[#allocation3 + $0x70] sm:$0xff]
        %v1186 = vld [vmem:[#allocation3 + $0x78] sm:$0xff]
        %1187 = vadd.xlane.f32.xlu0 %v930
        %v1188 = vpop.xlane.xlu0 %1187
        %1189 = vadd.xlane.f32.xlu0 %v931
        %v1190 = vpop.xlane.xlu0 %1189
        %1191 = vadd.xlane.f32.xlu0 %v932
        %v1192 = vpop.xlane.xlu0 %1191
        %1193 = vadd.xlane.f32.xlu0 %v933
        %v1194 = vpop.xlane.xlu0 %1193
        %1195 = vadd.xlane.f32.xlu0 %v934
        %v1196 = vpop.xlane.xlu0 %1195
        %1197 = vadd.xlane.f32.xlu0 %v935
        %v1198 = vpop.xlane.xlu0 %1197
        %1199 = vadd.xlane.f32.xlu0 %v936
        %v1200 = vpop.xlane.xlu0 %1199
        %1201 = vadd.xlane.f32.xlu0 %v937
        %v1202 = vpop.xlane.xlu0 %1201
        %1203 = vadd.xlane.f32.xlu0 %v938
        %v1204 = vpop.xlane.xlu0 %1203
        %1205 = vadd.xlane.f32.xlu0 %v939
        %v1206 = vpop.xlane.xlu0 %1205
        %1207 = vadd.xlane.f32.xlu0 %v940
        %v1208 = vpop.xlane.xlu0 %1207
        %1209 = vadd.xlane.f32.xlu0 %v941
        %v1210 = vpop.xlane.xlu0 %1209
        %1211 = vadd.xlane.f32.xlu0 %v942
        %v1212 = vpop.xlane.xlu0 %1211
        %1213 = vadd.xlane.f32.xlu0 %v943
        %v1214 = vpop.xlane.xlu0 %1213
        %1215 = vadd.xlane.f32.xlu0 %v944
        %v1216 = vpop.xlane.xlu0 %1215
        %1217 = vadd.xlane.f32.xlu0 %v945
        %v1218 = vpop.xlane.xlu0 %1217
        %v1219 = vadd.f32 %v1171, %v1188
        %v1220 = vadd.f32 %v1172, %v1190
        %v1221 = vadd.f32 %v1173, %v1192
        %v1222 = vadd.f32 %v1174, %v1194
        %v1223 = vadd.f32 %v1175, %v1196
        %v1224 = vadd.f32 %v1176, %v1198
        %v1225 = vadd.f32 %v1177, %v1200
        %v1226 = vadd.f32 %v1178, %v1202
        %v1227 = vadd.f32 %v1179, %v1204
        %v1228 = vadd.f32 %v1180, %v1206
        %v1229 = vadd.f32 %v1181, %v1208
        %v1230 = vadd.f32 %v1182, %v1210
        %v1231 = vadd.f32 %v1183, %v1212
        %v1232 = vadd.f32 %v1184, %v1214
        %v1233 = vadd.f32 %v1185, %v1216
        %v1234 = vadd.f32 %v1186, %v1218
        %vm1235 = vcmask 7168
        %1236 = vst.msk [vmem:[#allocation3] sm:$0xff] %vm1235, %v1219
        %1237 = vst.msk [vmem:[#allocation3 + $0x8] sm:$0xff] %vm1235, %v1220
        %1238 = vst.msk [vmem:[#allocation3 + $0x10] sm:$0xff] %vm1235, %v1221
        %1239 = vst.msk [vmem:[#allocation3 + $0x18] sm:$0xff] %vm1235, %v1222
        %1240 = vst.msk [vmem:[#allocation3 + $0x20] sm:$0xff] %vm1235, %v1223
        %1241 = vst.msk [vmem:[#allocation3 + $0x28] sm:$0xff] %vm1235, %v1224
        %1242 = vst.msk [vmem:[#allocation3 + $0x30] sm:$0xff] %vm1235, %v1225
        %1243 = vst.msk [vmem:[#allocation3 + $0x38] sm:$0xff] %vm1235, %v1226
        %1244 = vst.msk [vmem:[#allocation3 + $0x40] sm:$0xff] %vm1235, %v1227
        %1245 = vst.msk [vmem:[#allocation3 + $0x48] sm:$0xff] %vm1235, %v1228
        %1246 = vst.msk [vmem:[#allocation3 + $0x50] sm:$0xff] %vm1235, %v1229
        %1247 = vst.msk [vmem:[#allocation3 + $0x58] sm:$0xff] %vm1235, %v1230
        %1248 = vst.msk [vmem:[#allocation3 + $0x60] sm:$0xff] %vm1235, %v1231
        %1249 = vst.msk [vmem:[#allocation3 + $0x68] sm:$0xff] %vm1235, %v1232
        %1250 = vst.msk [vmem:[#allocation3 + $0x70] sm:$0xff] %vm1235, %v1233
        %1251 = vst.msk [vmem:[#allocation3 + $0x78] sm:$0xff] %vm1235, %v1234
        %p1252 = scmp.eq.s32.totalorder %s43, 1
        // Predicated region
        $region65: #{tpu_custom_call.1} parent=43 // pred_check
          %p1253 = pneg %p1252
        $region66: #{tpu_custom_call.1} parent=43 // pred_check_branch
          %1255 = sbr.rel (%p1253) target = $region68
        $region67: #{tpu_custom_call.1} parent=43 // pred_region
          %v1256 = vld [vmem:[#allocation2] sm:$0xff]
          %v1257 = vld [vmem:[#allocation2 + $0x8] sm:$0xff]
          %v1258 = vld [vmem:[#allocation2 + $0x10] sm:$0xff]
          %v1259 = vld [vmem:[#allocation2 + $0x18] sm:$0xff]
          %v1260 = vld [vmem:[#allocation2 + $0x20] sm:$0xff]
          %v1261 = vld [vmem:[#allocation2 + $0x28] sm:$0xff]
          %v1262 = vld [vmem:[#allocation2 + $0x30] sm:$0xff]
          %v1263 = vld [vmem:[#allocation2 + $0x38] sm:$0xff]
          %v1264 = vld [vmem:[#allocation2 + $0x40] sm:$0xff]
          %v1265 = vld [vmem:[#allocation2 + $0x48] sm:$0xff]
          %v1266 = vld [vmem:[#allocation2 + $0x50] sm:$0xff]
          %v1267 = vld [vmem:[#allocation2 + $0x58] sm:$0xff]
          %v1268 = vld [vmem:[#allocation2 + $0x60] sm:$0xff]
          %v1269 = vld [vmem:[#allocation2 + $0x68] sm:$0xff]
          %v1270 = vld [vmem:[#allocation2 + $0x70] sm:$0xff]
          %v1271 = vld [vmem:[#allocation2 + $0x78] sm:$0xff]
          %v1272 = vadd.f32 %v1256, %v707
          %v1273 = vadd.f32 %v1257, %v707
          %v1274 = vadd.f32 %v1258, %v707
          %v1275 = vadd.f32 %v1259, %v707
          %v1276 = vadd.f32 %v1260, %v707
          %v1277 = vadd.f32 %v1261, %v707
          %v1278 = vadd.f32 %v1262, %v707
          %v1279 = vadd.f32 %v1263, %v707
          %v1280 = vadd.f32 %v1264, %v707
          %v1281 = vadd.f32 %v1265, %v707
          %v1282 = vadd.f32 %v1266, %v707
          %v1283 = vadd.f32 %v1267, %v707
          %v1284 = vadd.f32 %v1268, %v707
          %v1285 = vadd.f32 %v1269, %v707
          %v1286 = vadd.f32 %v1270, %v707
          %v1287 = vadd.f32 %v1271, %v707
          %1288 = vst [vmem:[%s554] sm:$0xff] %v1272
          %1289 = vst [vmem:[%s554 + $0x8] sm:$0xff] %v1273
          %1290 = vst [vmem:[%s554 + $0x10] sm:$0xff] %v1274
          %1291 = vst [vmem:[%s554 + $0x18] sm:$0xff] %v1275
          %1292 = vst [vmem:[%s554 + $0x20] sm:$0xff] %v1276
          %1293 = vst [vmem:[%s554 + $0x28] sm:$0xff] %v1277
          %1294 = vst [vmem:[%s554 + $0x30] sm:$0xff] %v1278
          %1295 = vst [vmem:[%s554 + $0x38] sm:$0xff] %v1279
          %1296 = vst [vmem:[%s554 + $0x40] sm:$0xff] %v1280
          %1297 = vst [vmem:[%s554 + $0x48] sm:$0xff] %v1281
          %1298 = vst [vmem:[%s554 + $0x50] sm:$0xff] %v1282
          %1299 = vst [vmem:[%s554 + $0x58] sm:$0xff] %v1283
          %1300 = vst [vmem:[%s554 + $0x60] sm:$0xff] %v1284
          %1301 = vst [vmem:[%s554 + $0x68] sm:$0xff] %v1285
          %1302 = vst [vmem:[%s554 + $0x70] sm:$0xff] %v1286
          %1303 = vst [vmem:[%s554 + $0x78] sm:$0xff] %v1287
          %v1304 = vsub.f32 %v1272, %v615
          %v1305 = vsub.f32 %v1273, %v616
          %v1306 = vsub.f32 %v1274, %v617
          %v1307 = vsub.f32 %v1275, %v618
          %v1308 = vsub.f32 %v1276, %v619
          %v1309 = vsub.f32 %v1277, %v620
          %v1310 = vsub.f32 %v1278, %v621
          %v1311 = vsub.f32 %v1279, %v622
          %v1312 = vsub.f32 %v1280, %v623
          %v1313 = vsub.f32 %v1281, %v624
          %v1314 = vsub.f32 %v1282, %v625
          %v1315 = vsub.f32 %v1283, %v626
          %v1316 = vsub.f32 %v1284, %v627
          %v1317 = vsub.f32 %v1285, %v628
          %v1318 = vsub.f32 %v1286, %v629
          %v1319 = vsub.f32 %v1287, %v630
          %v1320 = vmul.f32 %v1304, %v1304
          %v1321 = vmul.f32 %v1305, %v1305
          %v1322 = vmul.f32 %v1306, %v1306
          %v1323 = vmul.f32 %v1307, %v1307
          %v1324 = vmul.f32 %v1308, %v1308
          %v1325 = vmul.f32 %v1309, %v1309
          %v1326 = vmul.f32 %v1310, %v1310
          %v1327 = vmul.f32 %v1311, %v1311
          %v1328 = vmul.f32 %v1312, %v1312
          %v1329 = vmul.f32 %v1313, %v1313
          %v1330 = vmul.f32 %v1314, %v1314
          %v1331 = vmul.f32 %v1315, %v1315
          %v1332 = vmul.f32 %v1316, %v1316
          %v1333 = vmul.f32 %v1317, %v1317
          %v1334 = vmul.f32 %v1318, %v1318
          %v1335 = vmul.f32 %v1319, %v1319
          %1336 = vadd.xlane.f32.xlu0 %v1320
          %v1337 = vpop.xlane.xlu0 %1336
          %1338 = vadd.xlane.f32.xlu0 %v1321
          %v1339 = vpop.xlane.xlu0 %1338
          %1340 = vadd.xlane.f32.xlu0 %v1322
          %v1341 = vpop.xlane.xlu0 %1340
          %1342 = vadd.xlane.f32.xlu0 %v1323
          %v1343 = vpop.xlane.xlu0 %1342
          %1344 = vadd.xlane.f32.xlu0 %v1324
          %v1345 = vpop.xlane.xlu0 %1344
          %1346 = vadd.xlane.f32.xlu0 %v1325
          %v1347 = vpop.xlane.xlu0 %1346
          %1348 = vadd.xlane.f32.xlu0 %v1326
          %v1349 = vpop.xlane.xlu0 %1348
          %1350 = vadd.xlane.f32.xlu0 %v1327
          %v1351 = vpop.xlane.xlu0 %1350
          %1352 = vadd.xlane.f32.xlu0 %v1328
          %v1353 = vpop.xlane.xlu0 %1352
          %1354 = vadd.xlane.f32.xlu0 %v1329
          %v1355 = vpop.xlane.xlu0 %1354
          %1356 = vadd.xlane.f32.xlu0 %v1330
          %v1357 = vpop.xlane.xlu0 %1356
          %1358 = vadd.xlane.f32.xlu0 %v1331
          %v1359 = vpop.xlane.xlu0 %1358
          %1360 = vadd.xlane.f32.xlu0 %v1332
          %v1361 = vpop.xlane.xlu0 %1360
          %1362 = vadd.xlane.f32.xlu0 %v1333
          %v1363 = vpop.xlane.xlu0 %1362
          %1364 = vadd.xlane.f32.xlu0 %v1334
          %v1365 = vpop.xlane.xlu0 %1364
          %1366 = vadd.xlane.f32.xlu0 %v1335
          %v1367 = vpop.xlane.xlu0 %1366
          %v1368 = vrcp.pop 128.0
          %v1369 = vmul.f32 %v1337, %v1368
          %v1370 = vmul.f32 %v1339, %v1368
          %v1371 = vmul.f32 %v1341, %v1368
          %v1372 = vmul.f32 %v1343, %v1368
          %v1373 = vmul.f32 %v1345, %v1368
          %v1374 = vmul.f32 %v1347, %v1368
          %v1375 = vmul.f32 %v1349, %v1368
          %v1376 = vmul.f32 %v1351, %v1368
          %v1377 = vmul.f32 %v1353, %v1368
          %v1378 = vmul.f32 %v1355, %v1368
          %v1379 = vmul.f32 %v1357, %v1368
          %v1380 = vmul.f32 %v1359, %v1368
          %v1381 = vmul.f32 %v1361, %v1368
          %v1382 = vmul.f32 %v1363, %v1368
          %v1383 = vmul.f32 %v1365, %v1368
          %v1384 = vmul.f32 %v1367, %v1368
          %1385 = vst.msk [vmem:[%s603] sm:$0xff] %vm1235, %v1369
          %1386 = vst.msk [vmem:[%s603 + $0x8] sm:$0xff] %vm1235, %v1370
          %1387 = vst.msk [vmem:[%s603 + $0x10] sm:$0xff] %vm1235, %v1371
          %1388 = vst.msk [vmem:[%s603 + $0x18] sm:$0xff] %vm1235, %v1372
          %1389 = vst.msk [vmem:[%s603 + $0x20] sm:$0xff] %vm1235, %v1373
          %1390 = vst.msk [vmem:[%s603 + $0x28] sm:$0xff] %vm1235, %v1374
          %1391 = vst.msk [vmem:[%s603 + $0x30] sm:$0xff] %vm1235, %v1375
          %1392 = vst.msk [vmem:[%s603 + $0x38] sm:$0xff] %vm1235, %v1376
          %1393 = vst.msk [vmem:[%s603 + $0x40] sm:$0xff] %vm1235, %v1377
          %1394 = vst.msk [vmem:[%s603 + $0x48] sm:$0xff] %vm1235, %v1378
          %1395 = vst.msk [vmem:[%s603 + $0x50] sm:$0xff] %vm1235, %v1379
          %1396 = vst.msk [vmem:[%s603 + $0x58] sm:$0xff] %vm1235, %v1380
          %1397 = vst.msk [vmem:[%s603 + $0x60] sm:$0xff] %vm1235, %v1381
          %1398 = vst.msk [vmem:[%s603 + $0x68] sm:$0xff] %vm1235, %v1382
          %1399 = vst.msk [vmem:[%s603 + $0x70] sm:$0xff] %vm1235, %v1383
          %1400 = vst.msk [vmem:[%s603 + $0x78] sm:$0xff] %vm1235, %v1384
          %v1401 = vld [vmem:[#allocation3] sm:$0xff]
          %v1402 = vld [vmem:[#allocation3 + $0x8] sm:$0xff]
          %v1403 = vld [vmem:[#allocation3 + $0x10] sm:$0xff]
          %v1404 = vld [vmem:[#allocation3 + $0x18] sm:$0xff]
          %v1405 = vld [vmem:[#allocation3 + $0x20] sm:$0xff]
          %v1406 = vld [vmem:[#allocation3 + $0x28] sm:$0xff]
          %v1407 = vld [vmem:[#allocation3 + $0x30] sm:$0xff]
          %v1408 = vld [vmem:[#allocation3 + $0x38] sm:$0xff]
          %v1409 = vld [vmem:[#allocation3 + $0x40] sm:$0xff]
          %v1410 = vld [vmem:[#allocation3 + $0x48] sm:$0xff]
          %v1411 = vld [vmem:[#allocation3 + $0x50] sm:$0xff]
          %v1412 = vld [vmem:[#allocation3 + $0x58] sm:$0xff]
          %v1413 = vld [vmem:[#allocation3 + $0x60] sm:$0xff]
          %v1414 = vld [vmem:[#allocation3 + $0x68] sm:$0xff]
          %v1415 = vld [vmem:[#allocation3 + $0x70] sm:$0xff]
          %v1416 = vld [vmem:[#allocation3 + $0x78] sm:$0xff]
          %1417 = vst.msk [vmem:[%s613] sm:$0xff] %vm1235, %v1401
          %1418 = vst.msk [vmem:[%s613 + $0x8] sm:$0xff] %vm1235, %v1402
          %1419 = vst.msk [vmem:[%s613 + $0x10] sm:$0xff] %vm1235, %v1403
          %1420 = vst.msk [vmem:[%s613 + $0x18] sm:$0xff] %vm1235, %v1404
          %1421 = vst.msk [vmem:[%s613 + $0x20] sm:$0xff] %vm1235, %v1405
          %1422 = vst.msk [vmem:[%s613 + $0x28] sm:$0xff] %vm1235, %v1406
          %1423 = vst.msk [vmem:[%s613 + $0x30] sm:$0xff] %vm1235, %v1407
          %1424 = vst.msk [vmem:[%s613 + $0x38] sm:$0xff] %vm1235, %v1408
          %1425 = vst.msk [vmem:[%s613 + $0x40] sm:$0xff] %vm1235, %v1409
          %1426 = vst.msk [vmem:[%s613 + $0x48] sm:$0xff] %vm1235, %v1410
          %1427 = vst.msk [vmem:[%s613 + $0x50] sm:$0xff] %vm1235, %v1411
          %1428 = vst.msk [vmem:[%s613 + $0x58] sm:$0xff] %vm1235, %v1412
          %1429 = vst.msk [vmem:[%s613 + $0x60] sm:$0xff] %vm1235, %v1413
          %1430 = vst.msk [vmem:[%s613 + $0x68] sm:$0xff] %vm1235, %v1414
          %1431 = vst.msk [vmem:[%s613 + $0x70] sm:$0xff] %vm1235, %v1415
          %1432 = vst.msk [vmem:[%s613 + $0x78] sm:$0xff] %vm1235, %v1416
        $region68: #{tpu_custom_call.1} parent=43 // pred_fallthru
          _
        %s1433 = sand.u32 %s233, 1
        %s1434 = scalar_lea.sflag [#allocation6], %s1433
        %s1435 = sand.u32 %s233, 1
        %s1436 = smul.addr %s1435, 128
        %s1437 = scalar_lea.vmem [#allocation12], %s1436
        %s1438 = sand.u32 %s261, 1
        %s1439 = scalar_lea.sflag [#allocation14], %s1438
        %s1440 = sand.u32 %s261, 1
        %s1441 = smul.addr %s1440, 128
        %s1442 = scalar_lea.vmem [#allocation13], %s1441
        %s1443 = smul.u32 16, %s42
        %p1444 = scmp.lt.s32.totalorder %s41, 1
        %s1445 = scalar_select %p1444, %s41, 1
        %p1446 = scmp.lt.s32.totalorder %s1443, 31
        %s1447 = scalar_select %p1446, %s1443, 31
        %s1448 = smul.addr %s1445, 32
        %s1449 = sadd.s32 %s1447, %s1448
        %s1450 = smul.addr %s1449, 8
        %s1451 = scalar_lea.vmem %s8, %s1450
        %s1452 = smul.u32 16, %s42
        %p1453 = scmp.lt.s32.totalorder %s41, 1
        %s1454 = scalar_select %p1453, %s41, 1
        %p1455 = scmp.lt.s32.totalorder %s1452, 31
        %s1456 = scalar_select %p1455, %s1452, 31
        %s1457 = smul.addr %s1454, 32
        %s1458 = sadd.s32 %s1456, %s1457
        %s1459 = smul.addr %s1458, 8
        %s1460 = scalar_lea.vmem %s9, %s1459
        // Predicated region
        $region69: #{tpu_custom_call.1} parent=43 // pred_check
          %p1461 = pneg %p243
        $region70: #{tpu_custom_call.1} parent=43 // pred_check_branch
          %1463 = sbr.rel (%p1461) target = $region72
        $region71: #{tpu_custom_call.1} parent=43 // pred_region
          %s1464 = smul.u32 16, %s42
          %s1466 = ssub.s32 2048, 2048
          %1467 = vsyncadd %s1434, %s1466
          %s1468 = smul.addr %s1464, 2
          %s1469 = sadd.s32 %s43, %s1468
          %s1470 = smul.addr %s41, 64
          %s1471 = sadd.s32 %s1469, %s1470
          %s1472 = smul.addr %s1471, 128
          %s1473 = scalar_lea.hbm %s6, %s1472
          %s1474 = sshll.u32 %s1437, 4
          %s1475 = int_to_ptr.vmem [resolvable:$true] %s1474
          %1480 = dma.vmem_to_hbm [thread:$0]  %s1475, 2048, %s1473, %s1434, 128, 256, 8
        $region72: #{tpu_custom_call.1} parent=43 // pred_fallthru
          _
        // Predicated region
        $region73: #{tpu_custom_call.1} parent=43 // pred_check
          %p1481 = pneg %p271
        $region74: #{tpu_custom_call.1} parent=43 // pred_check_branch
          %1483 = sbr.rel (%p1481) target = $region76
        $region75: #{tpu_custom_call.1} parent=43 // pred_region
          %s1484 = smul.u32 16, %s42
          %s1486 = ssub.s32 2048, 2048
          %1487 = vsyncadd %s1439, %s1486
          %s1488 = smul.addr %s41, 32
          %s1489 = sadd.s32 %s1484, %s1488
          %s1490 = smul.addr %s1489, 128
          %s1491 = scalar_lea.hbm %s7, %s1490
          %s1492 = sshll.u32 %s1442, 4
          %s1493 = int_to_ptr.vmem [resolvable:$true] %s1492
          %1498 = dma.vmem_to_hbm [thread:$0]  %s1493, 2048, %s1491, %s1439, 128, 128, 8
        $region76: #{tpu_custom_call.1} parent=43 // pred_fallthru
          _
        // Predicated region
        $region77: #{tpu_custom_call.1} parent=43 // pred_check
          %p1499 = pneg %p299
        $region78: #{tpu_custom_call.1} parent=43 // pred_check_branch
          %1501 = sbr.rel (%p1499) target = $region80
        $region79: #{tpu_custom_call.1} parent=43 // pred_region
          %s1502 = smul.u32 16, %s42
        $region80: #{tpu_custom_call.1} parent=43 // pred_fallthru
          _
        // Predicated region
        $region81: #{tpu_custom_call.1} parent=43 // pred_check
          %p1503 = pneg %p327
        $region82: #{tpu_custom_call.1} parent=43 // pred_check_branch
          %1505 = sbr.rel (%p1503) target = $region84
        $region83: #{tpu_custom_call.1} parent=43 // pred_region
          %s1506 = smul.u32 16, %s42
        $region84: #{tpu_custom_call.1} parent=43 // pred_fallthru
          _
      $region44: #{tpu_custom_call.1} parent=5 // pred_fallthru
        _
      %p1507 = scmp.le.s32.totalorder 2, %s31
      // Predicated region
      $region85: #{tpu_custom_call.1} parent=5 // pred_check
        %p1508 = pneg %p1507
      $region86: #{tpu_custom_call.1} parent=5 // pred_check_branch
        %1510 = sbr.rel (%p1508) target = $region88
      $region87: #{tpu_custom_call.1} parent=5 // pred_region
        %s1511 = ssub.s32 %s31, 2
        // Predicated region
        $region89: #{tpu_custom_call.1} parent=87 // pred_check
          %p1512 = pneg %p249
        $region90: #{tpu_custom_call.1} parent=87 // pred_check_branch
          %1514 = sbr.rel (%p1512) target = $region92
        $region91: #{tpu_custom_call.1} parent=87 // pred_region
          %s1515 = sand.u32 %s234, 1
          %s1516 = scalar_lea.sflag [#allocation6], %s1515
          %s1517 = sand.u32 %s234, 1
          %s1518 = smul.addr %s1517, 128
          %s1519 = scalar_lea.vmem [#allocation12], %s1518
          %1520 = dma.done %s1516, 2048
        $region92: #{tpu_custom_call.1} parent=87 // pred_fallthru
          _
        // Predicated region
        $region93: #{tpu_custom_call.1} parent=87 // pred_check
          %p1521 = pneg %p277
        $region94: #{tpu_custom_call.1} parent=87 // pred_check_branch
          %1523 = sbr.rel (%p1521) target = $region96
        $region95: #{tpu_custom_call.1} parent=87 // pred_region
          %s1524 = sand.u32 %s262, 1
          %s1525 = scalar_lea.sflag [#allocation14], %s1524
          %s1526 = sand.u32 %s262, 1
          %s1527 = smul.addr %s1526, 128
          %s1528 = scalar_lea.vmem [#allocation13], %s1527
          %1529 = dma.done %s1525, 2048
        $region96: #{tpu_custom_call.1} parent=87 // pred_fallthru
          _
        // Predicated region
        $region97: #{tpu_custom_call.1} parent=87 // pred_check
          %p1530 = pneg %p305
        $region98: #{tpu_custom_call.1} parent=87 // pred_check_branch
          %1532 = sbr.rel (%p1530) target = $region100
        $region99: #{tpu_custom_call.1} parent=87 // pred_region
          %s1533 = smul.u32 16, %s45
          %p1534 = scmp.lt.s32.totalorder %s44, 1
          %s1535 = scalar_select %p1534, %s44, 1
          %p1536 = scmp.lt.s32.totalorder %s1533, 31
          %s1537 = scalar_select %p1536, %s1533, 31
          %s1538 = smul.addr %s1535, 32
          %s1539 = sadd.s32 %s1537, %s1538
          %s1540 = smul.addr %s1539, 8
          %s1541 = scalar_lea.vmem %s8, %s1540
        $region100: #{tpu_custom_call.1} parent=87 // pred_fallthru
          _
        // Predicated region
        $region101: #{tpu_custom_call.1} parent=87 // pred_check
          %p1542 = pneg %p333
        $region102: #{tpu_custom_call.1} parent=87 // pred_check_branch
          %1544 = sbr.rel (%p1542) target = $region104
        $region103: #{tpu_custom_call.1} parent=87 // pred_region
          %s1545 = smul.u32 16, %s45
          %p1546 = scmp.lt.s32.totalorder %s44, 1
          %s1547 = scalar_select %p1546, %s44, 1
          %p1548 = scmp.lt.s32.totalorder %s1545, 31
          %s1549 = scalar_select %p1548, %s1545, 31
          %s1550 = smul.addr %s1547, 32
          %s1551 = sadd.s32 %s1549, %s1550
          %s1552 = smul.addr %s1551, 8
          %s1553 = scalar_lea.vmem %s9, %s1552
        $region104: #{tpu_custom_call.1} parent=87 // pred_fallthru
          _
      $region88: #{tpu_custom_call.1} parent=5 // pred_fallthru
        _
    $region6: #{tpu_custom_call.1} parent=1 // loop_footer
      %s35 = sadd.s32 1, %s31
    $region7: #{tpu_custom_call.1} parent=1 // loop_footer_branch
      %30 = sbr.rel target = $region3
    $region8: #{tpu_custom_call.1} parent=1 // loop_exit
      _
    %1554 = vsyncpa [#allocation5], 1
    %s1555 = scalar_lea.sflag [#allocation5], 1
    %1556 = vsyncpa %s1555, 1
    %1557 = vsyncpa [#allocation8], 1
    %s1558 = scalar_lea.sflag [#allocation8], 1
    %1559 = vsyncpa %s1558, 1
    %1560 = vsyncpa [#allocation11], 1
    %s1561 = scalar_lea.sflag [#allocation11], 1
    %1562 = vsyncpa %s1561, 1
    %1563 = vsyncpa [#allocation6], 1
    %s1564 = scalar_lea.sflag [#allocation6], 1
    %1565 = vsyncpa %s1564, 1
    %1566 = vsyncpa [#allocation14], 1
    %s1567 = scalar_lea.sflag [#allocation14], 1
    %1568 = vsyncpa %s1567, 1

</llo_original>
